<compile_context>
chip_gen: v7x
topology: tpu7x:2x2x1
jax: 0.10.0
libtpu: 0.0.40
codegen_flags: <defaults>
</compile_context>

<pallas_src>
import functools
import math

import jax
import jax.numpy as jnp
from jax.experimental import pallas as pl
from jax.experimental.pallas import tpu as pltpu

WINDOW_SIZE = 11
SIGMA = 1.5
C1 = 0.01 ** 2
C2 = 0.03 ** 2


def _gaussian_taps(window_size=WINDOW_SIZE, sigma=SIGMA):
    # Deterministic "parameter" of the SSIM module (create_window / gaussian).
    g = [math.exp(-((x - window_size // 2) ** 2) / (2.0 * sigma ** 2))
         for x in range(window_size)]
    s = sum(g)
    return tuple(v / s for v in g)


def _round_up(x, m):
    return ((x + m - 1) // m) * m


def _vmem_limit_bytes():
    # Per-generation scoped-VMEM limit with DMA headroom (v7x: 64 MiB physical).
    try:
        info = pltpu.get_tpu_info()
        cap = int(getattr(info, "vmem_capacity_bytes", 128 * 1024 * 1024))
    except Exception:  # pragma: no cover - CPU / interpret fallback
        cap = 128 * 1024 * 1024
    if cap <= 0:
        cap = 128 * 1024 * 1024
    return max(32 * 1024 * 1024, min(cap - 16 * 1024 * 1024, 112 * 1024 * 1024))


def _pick_strip_rows(H, W3, Wa, vmem_budget_bytes):
    """Largest strip height (multiple of 8 dividing H) whose working set fits."""
    def footprint(th):
        scratch = 5 * (_round_up(th + 16, 8)) * Wa * 4          # padded planes
        inputs = 2 * 2 * th * W3 * 4                             # 2 imgs, 2 bufs
        temps = 7 * th * Wa * 4                                  # live blur planes
        return scratch + inputs + temps

    if H % 8 != 0 or footprint(H) <= vmem_budget_bytes:
        return H
    best = 8
    for th in range(8, H, 8):
        if H % th == 0 and footprint(th) <= vmem_budget_bytes:
            best = th
    return best


# -----------------------------------------------------------------------------
# Fused SSIM + L1 kernel: one (batch, row-strip) tile per grid step, all channels
# processed simultaneously in channel-interleaved columns (j = w*C + c).
# -----------------------------------------------------------------------------
def _ssim_l1_kernel(x1_ref, x1t_ref, x1b_ref, x2_ref, x2t_ref, x2b_ref, out_ref,
                    p1, p2, p11, p22, p12, *, TH, W3, C, taps):
    s = pl.program_id(1)
    ns = pl.num_programs(1)
    Ha, Wa = p1.shape
    hr = x1t_ref.shape[1]
    win = len(taps)
    half = win // 2
    row0 = 8                       # sublane-aligned placement of the strip rows

    # Zero p1/p2: the untouched margins are the conv's zero padding (top/bottom
    # halo at the image border, and >= half*C zero columns on the right which the
    # roll-wrap relies on).
    p1[...] = jnp.zeros_like(p1)
    p2[...] = jnp.zeros_like(p2)

    # Lane/sublane-aligned stores of the strip and its 8-row neighbour halos.
    p1[row0:row0 + TH, 0:W3] = x1_ref[0]
    p2[row0:row0 + TH, 0:W3] = x2_ref[0]

    @pl.when(s > 0)
    def _():
        p1[row0 - hr:row0, 0:W3] = x1t_ref[0]
        p2[row0 - hr:row0, 0:W3] = x2t_ref[0]

    @pl.when(s < ns - 1)
    def _():
        p1[row0 + TH:row0 + TH + hr, 0:W3] = x1b_ref[0]
        p2[row0 + TH:row0 + TH + hr, 0:W3] = x2b_ref[0]

    # Moment planes, computed once (saves ~3 multiplies x 11 taps per element).
    a = p1[...]
    b = p2[...]
    p11[...] = a * a
    p22[...] = b * b
    p12[...] = a * b

    # Fused L1 partial column sums over this strip's own rows (margin cols are 0).
    l1_cols = jnp.sum(jnp.abs(a[row0:row0 + TH, :] - b[row0:row0 + TH, :]),
                      axis=0, keepdims=True)

    # Vertical (sublane) Gaussian: slices straight off the refs; symmetric taps
    # are paired (6 multiplies instead of 11 per accumulator).
    def vblur(q):
        acc = taps[half] * q[row0:row0 + TH, :]
        for k in range(half):
            lo = q[row0 - half + k:row0 - half + k + TH, :]
            hi = q[row0 + half - k:row0 + half - k + TH, :]
            acc = acc + taps[k] * (lo + hi)
        return acc

    # Horizontal (lane) Gaussian via XLU rolls; the circular wrap only reaches the
    # zero right-margin (for valid columns) or masked columns.  Symmetric taps.
    def hblur(v):
        acc = taps[half] * v
        for k in range(half):
            m = C * (half - k)
            acc = acc + taps[k] * (pltpu.roll(v, shift=m, axis=1) +
                                   pltpu.roll(v, shift=Wa - m, axis=1))
        return acc

    # One blurred quantity at a time -> at most ~6 (TH, Wa) f32 planes live.
    mu1 = hblur(vblur(p1))
    mu1_sq = mu1 * mu1
    mu2 = hblur(vblur(p2))
    mu2_sq = mu2 * mu2
    mu1_mu2 = mu1 * mu2
    den_mu = mu1_sq + mu2_sq + C1
    num_mu = 2.0 * mu1_mu2 + C1

    sig1 = hblur(vblur(p11)) - mu1_sq
    sig2 = hblur(vblur(p22)) - mu2_sq
    den = den_mu * (sig1 + sig2 + C2)
    num = num_mu * (2.0 * (hblur(vblur(p12)) - mu1_mu2) + C2)

    r = pl.reciprocal(den, approx=True)          # EUP slot
    r = r * (2.0 - den * r)                      # one Newton step -> ~f32 accuracy
    col = jax.lax.broadcasted_iota(jnp.int32, (TH, Wa), 1)
    ssim_map = jnp.where(col < W3, num * r, 0.0)

    out_ref[0, 0, 0:1, :] = jnp.sum(ssim_map, axis=0, keepdims=True)
    out_ref[0, 0, 1:2, :] = l1_cols
    # Rows 2..7 of the output tile are never read by the wrapper; left unwritten.


def ssim_l1_sums(img1_nhwc, img2_nhwc, window_size=WINDOW_SIZE):
    """Returns (sum of SSIM map over B*C*H*W, sum of |img1 - img2|)."""
    B, H, W, C = img1_nhwc.shape
    assert img2_nhwc.shape == (B, H, W, C)
    half = window_size // 2
    W3 = W * C
    # Contiguous reshape (no transpose): channel-interleaved columns j = w*C + c.
    x1 = img1_nhwc.reshape(B, H, W3).astype(jnp.float32)
    x2 = img2_nhwc.reshape(B, H, W3).astype(jnp.float32)

    Wa = _round_up(W3 + half * C, 128)
    # Correctness of the roll-wrap masking relies on >= half*C zero right columns.
    assert Wa - W3 >= half * C

    vmem_limit = _vmem_limit_bytes()
    TH = _pick_strip_rows(H, W3, Wa, int(0.7 * vmem_limit))
    assert H % TH == 0
    NS = H // TH
    Ha = _round_up(TH + 16, 8)
    hr = 8 if H >= 8 else H
    blk_t = max(TH // hr, 1)
    last_hb = pl.cdiv(H, hr) - 1

    taps = _gaussian_taps(window_size)
    kernel = functools.partial(_ssim_l1_kernel, TH=TH, W3=W3, C=C, taps=taps)

    main_spec = pl.BlockSpec((1, TH, W3), lambda b, s: (b, s, 0))
    top_spec = pl.BlockSpec(
        (1, hr, W3), lambda b, s: (b, jnp.maximum(s * blk_t - 1, 0), 0))
    bot_spec = pl.BlockSpec(
        (1, hr, W3), lambda b, s: (b, jnp.minimum((s + 1) * blk_t, last_hb), 0))

    sums = pl.pallas_call(
        kernel,
        out_shape=jax.ShapeDtypeStruct((B, NS, 8, Wa), jnp.float32),
        grid=(B, NS),
        in_specs=[main_spec, top_spec, bot_spec, main_spec, top_spec, bot_spec],
        out_specs=pl.BlockSpec((1, 1, 8, Wa), lambda b, s: (b, s, 0, 0)),
        scratch_shapes=[pltpu.VMEM((Ha, Wa), jnp.float32) for _ in range(5)],
        compiler_params=pltpu.CompilerParams(
            dimension_semantics=("parallel", "parallel"),
            vmem_limit_bytes=vmem_limit),
    )(x1, x1, x1, x2, x2, x2)

    return jnp.sum(sums[:, :, 0, :]), jnp.sum(sums[:, :, 1, :])


# -----------------------------------------------------------------------------
# Small reduction kernels: (TR, L) blocks (~1 MiB) with in-kernel tail masking,
# gridded accumulator.  No host-side pad/reshape copies.
# -----------------------------------------------------------------------------
def _mul_sum_kernel(a_ref, b_ref, o_ref, *, M, TR):
    i = pl.program_id(0)

    @pl.when(i == 0)
    def _():
        o_ref[...] = jnp.zeros_like(o_ref)

    rows = jax.lax.broadcasted_iota(jnp.int32, a_ref.shape, 0) + i * TR
    prod = jnp.where(rows < M, a_ref[...] * b_ref[...], 0.0)
    o_ref[...] = o_ref[...] + jnp.sum(prod, axis=0, keepdims=True)


def _sum_kernel(a_ref, o_ref, *, M, TR):
    i = pl.program_id(0)

    @pl.when(i == 0)
    def _():
        o_ref[...] = jnp.zeros_like(o_ref)

    rows = jax.lax.broadcasted_iota(jnp.int32, a_ref.shape, 0) + i * TR
    vals = jnp.where(rows < M, a_ref[...], 0.0)
    o_ref[...] = o_ref[...] + jnp.sum(vals, axis=0, keepdims=True)


def _as_2d(a):
    a = a.astype(jnp.float32)
    if a.ndim == 0:
        return a.reshape(1, 1)
    return a.reshape(-1, a.shape[-1])


def _row_tile(M, L, target_bytes=1 << 20):
    cand = max(8, (target_bytes // (4 * max(L, 1))) // 8 * 8)
    return min(cand, M)


def _pallas_mul_sum(a, b):
    """sum(a * b) over all elements."""
    a2 = _as_2d(a)
    b2 = _as_2d(b)
    M, L = a2.shape
    TR = _row_tile(M, L)
    steps = pl.cdiv(M, TR)
    out = pl.pallas_call(
        functools.partial(_mul_sum_kernel, M=M, TR=TR),
        out_shape=jax.ShapeDtypeStruct((1, L), jnp.float32),
        grid=(steps,),
        in_specs=[pl.BlockSpec((TR, L), lambda i: (i, 0)),
                  pl.BlockSpec((TR, L), lambda i: (i, 0))],
        out_specs=pl.BlockSpec((1, L), lambda i: (0, 0)),
        compiler_params=pltpu.CompilerParams(dimension_semantics=("arbitrary",)),
    )(a2, b2)
    return jnp.sum(out)


def _pallas_sum(a):
    """sum(a) over all elements."""
    a2 = _as_2d(a)
    M, L = a2.shape
    TR = _row_tile(M, L)
    steps = pl.cdiv(M, TR)
    out = pl.pallas_call(
        functools.partial(_sum_kernel, M=M, TR=TR),
        out_shape=jax.ShapeDtypeStruct((1, L), jnp.float32),
        grid=(steps,),
        in_specs=[pl.BlockSpec((TR, L), lambda i: (i, 0))],
        out_specs=pl.BlockSpec((1, L), lambda i: (0, 0)),
        compiler_params=pltpu.CompilerParams(dimension_semantics=("arbitrary",)),
    )(a2)
    return jnp.sum(out)


# -----------------------------------------------------------------------------
# Loss module (defaults: lbs/sdf/eikonal/vgg weights = 0, var_expression=None)
# -----------------------------------------------------------------------------
class LossPallas:
    def __init__(self, lbs_weight=0, sdf_consistency_weight=0,
                 eikonal_weight=0, vgg_feature_weight=0):
        self.lbs_weight = lbs_weight
        self.sdf_consistency_weight = sdf_consistency_weight
        self.eikonal_weight = eikonal_weight
        self.vgg_feature_weight = vgg_feature_weight
        # TODO(synk): VGG perceptual loss (pretrained VGG16) and FLAME
        # lbs/posedirs/shapedirs branches are gated off by the default zero
        # weights and are not translated.

    def get_rgb_loss(self, rgb_values, rgb_gt):
        B, H, W, Cc = rgb_values.shape
        img_gt = rgb_gt.reshape(B, H, W, Cc)
        ssim_sum, l1_sum = ssim_l1_sums(rgb_values, img_gt)    # one fused pass
        n = B * Cc * H * W
        ssim = ssim_sum / n
        lssim = 1.0 - ssim
        rgb_loss = l1_sum / n
        return rgb_loss, lssim

    def forward(self, model_outputs, ground_truth, epoch):
        rgb_loss, ssim_loss = self.get_rgb_loss(model_outputs['rgb_image'],
                                                ground_truth['rgb'])
        loss = 1.0 * rgb_loss + 0.25 * ssim_loss
        out = {'loss': loss, 'rgb_loss': rgb_loss, 'ssim_loss': ssim_loss}

        lambda_normal = 0.05 if epoch > 60 else 0.0
        lambda_dist = 0.0
        rend_dist = model_outputs['rend_dist']
        rend_normal = model_outputs['rend_normal']    # (3, H, W)
        surf_normal = model_outputs['surf_normal']    # (3, H, W)

        # Skip the reduction kernels entirely when their weight is exactly zero
        # (lambda * mean == 0 exactly, matching the reference).
        if lambda_normal != 0.0:
            n_spatial = 1
            for d in rend_normal.shape[1:]:
                n_spatial *= d
            dot_sum = _pallas_mul_sum(rend_normal, surf_normal)
            normal_loss = lambda_normal * (1.0 - dot_sum / n_spatial)
        else:
            normal_loss = 0.0
        if lambda_dist != 0.0:
            dist_loss = lambda_dist * (_pallas_sum(rend_dist) / rend_dist.size)
        else:
            dist_loss = 0.0

        out['loss'] = out['loss'] + dist_loss + normal_loss
        return out


if __name__ == "__main__":
    key = jax.random.PRNGKey(0)
    B, H, W = 2, 16, 16
    k1, k2, k3, k4, k5 = jax.random.split(key, 5)

    rgb_image = jax.random.uniform(k1, (B, H, W, 3), jnp.float32)
    rgb_gt = jax.random.uniform(k2, (B, H * W, 3), jnp.float32)
    rend_dist = jax.random.uniform(k3, (1, H, W), jnp.float32)

    def unit_normals(k, shape):
        v = jax.random.normal(k, shape, jnp.float32)
        return v / jnp.linalg.norm(v, axis=0, keepdims=True)

    rend_normal = unit_normals(k4, (3, H, W))
    surf_normal = unit_normals(k5, (3, H, W))

    loss_mod = LossPallas()
    out = loss_mod.forward(
        {'rgb_image': rgb_image, 'rend_dist': rend_dist,
         'rend_normal': rend_normal, 'surf_normal': surf_normal},
        {'rgb': rgb_gt},
        epoch=100,
    )
    jax.block_until_ready(out['loss'])
    print("KERNEL_OK")
</pallas_src>

<mosaic_0001>
module attributes {stable_mosaic.version = 11 : i64} {
  func.func @_ssim_l1_kernel(%arg0: i32, %arg1: i32, %arg2: memref<1x16x48xf32, #tpu.memory_space<vmem>>, %arg3: memref<1x8x48xf32, #tpu.memory_space<vmem>>, %arg4: memref<1x8x48xf32, #tpu.memory_space<vmem>>, %arg5: memref<1x16x48xf32, #tpu.memory_space<vmem>>, %arg6: memref<1x8x48xf32, #tpu.memory_space<vmem>>, %arg7: memref<1x8x48xf32, #tpu.memory_space<vmem>>, %arg8: memref<1x1x8x128xf32, #tpu.memory_space<vmem>>, %arg9: memref<32x128xf32, #tpu.memory_space<vmem>>, %arg10: memref<32x128xf32, #tpu.memory_space<vmem>>, %arg11: memref<32x128xf32, #tpu.memory_space<vmem>>, %arg12: memref<32x128xf32, #tpu.memory_space<vmem>>, %arg13: memref<32x128xf32, #tpu.memory_space<vmem>>) attributes {dimension_semantics = [#tpu.dimension_semantics<parallel>, #tpu.dimension_semantics<parallel>], iteration_bounds = array<i64: 2, 1>, scalar_prefetch = 0 : i64, scratch_operands = 5 : i64, tpu.core_type = #tpu.core_type<tc>, window_params = [{transform_indices = @transform_0, window_bounds = array<i64: 1, 16, 48>}, {transform_indices = @transform_1, window_bounds = array<i64: 1, 8, 48>}, {transform_indices = @transform_2, window_bounds = array<i64: 1, 8, 48>}, {transform_indices = @transform_3, window_bounds = array<i64: 1, 16, 48>}, {transform_indices = @transform_4, window_bounds = array<i64: 1, 8, 48>}, {transform_indices = @transform_5, window_bounds = array<i64: 1, 8, 48>}, {transform_indices = @transform_6, window_bounds = array<i64: 1, 1, 8, 128>}]} {
    %cst = arith.constant 0.000000e+00 : f32
    %0 = vector.broadcast %cst : f32 to vector<32x128xf32>
    %c0 = arith.constant 0 : index
    %c0_0 = arith.constant 0 : index
    %1 = vector.load %arg9[%c0, %c0_0] : memref<32x128xf32, #tpu.memory_space<vmem>>, vector<32x128xf32>
    tpu.vector_store %arg9[%c0, %c0_0], %0 {strides = array<i32>} : memref<32x128xf32, #tpu.memory_space<vmem>>, vector<32x128xf32>,
    %cst_1 = arith.constant 0.000000e+00 : f32
    %2 = vector.broadcast %cst_1 : f32 to vector<32x128xf32>
    %c0_2 = arith.constant 0 : index
    %c0_3 = arith.constant 0 : index
    %3 = vector.load %arg10[%c0_2, %c0_3] : memref<32x128xf32, #tpu.memory_space<vmem>>, vector<32x128xf32>
    tpu.vector_store %arg10[%c0_2, %c0_3], %2 {strides = array<i32>} : memref<32x128xf32, #tpu.memory_space<vmem>>, vector<32x128xf32>,
    %c0_4 = arith.constant 0 : index
    %c0_5 = arith.constant 0 : index
    %c0_6 = arith.constant 0 : index
    %4 = vector.load %arg2[%c0_4, %c0_5, %c0_6] : memref<1x16x48xf32, #tpu.memory_space<vmem>>, vector<1x16x48xf32>
    %5 = vector.shape_cast %4 : vector<1x16x48xf32> to vector<16x48xf32>
    %c8 = arith.constant 8 : index
    %c0_7 = arith.constant 0 : index
    %6 = vector.load %arg9[%c8, %c0_7] : memref<32x128xf32, #tpu.memory_space<vmem>>, vector<16x48xf32>
    tpu.vector_store %arg9[%c8, %c0_7], %5 {strides = array<i32>} : memref<32x128xf32, #tpu.memory_space<vmem>>, vector<16x48xf32>,
    %c0_8 = arith.constant 0 : index
    %c0_9 = arith.constant 0 : index
    %c0_10 = arith.constant 0 : index
    %7 = vector.load %arg5[%c0_8, %c0_9, %c0_10] : memref<1x16x48xf32, #tpu.memory_space<vmem>>, vector<1x16x48xf32>
    %8 = vector.shape_cast %7 : vector<1x16x48xf32> to vector<16x48xf32>
    %c8_11 = arith.constant 8 : index
    %c0_12 = arith.constant 0 : index
    %9 = vector.load %arg10[%c8_11, %c0_12] : memref<32x128xf32, #tpu.memory_space<vmem>>, vector<16x48xf32>
    tpu.vector_store %arg10[%c8_11, %c0_12], %8 {strides = array<i32>} : memref<32x128xf32, #tpu.memory_space<vmem>>, vector<16x48xf32>,
    %c0_i32 = arith.constant 0 : i32
    %10 = arith.cmpi sgt, %arg1, %c0_i32 : i32
    %11 = arith.extui %10 : i1 to i32
    %c0_i32_13 = arith.constant 0 : i32
    %12 = arith.cmpi ne, %11, %c0_i32_13 : i32
    scf.if %12 {
      %c0_243 = arith.constant 0 : index
      %c0_244 = arith.constant 0 : index
      %c0_245 = arith.constant 0 : index
      %396 = vector.load %arg3[%c0_243, %c0_244, %c0_245] : memref<1x8x48xf32, #tpu.memory_space<vmem>>, vector<1x8x48xf32>
      %397 = vector.shape_cast %396 : vector<1x8x48xf32> to vector<8x48xf32>
      %c0_246 = arith.constant 0 : index
      %c0_247 = arith.constant 0 : index
      %398 = vector.load %arg9[%c0_246, %c0_247] : memref<32x128xf32, #tpu.memory_space<vmem>>, vector<8x48xf32>
      tpu.vector_store %arg9[%c0_246, %c0_247], %397 {strides = array<i32>} : memref<32x128xf32, #tpu.memory_space<vmem>>, vector<8x48xf32>,
      %c0_248 = arith.constant 0 : index
      %c0_249 = arith.constant 0 : index
      %c0_250 = arith.constant 0 : index
      %399 = vector.load %arg6[%c0_248, %c0_249, %c0_250] : memref<1x8x48xf32, #tpu.memory_space<vmem>>, vector<1x8x48xf32>
      %400 = vector.shape_cast %399 : vector<1x8x48xf32> to vector<8x48xf32>
      %c0_251 = arith.constant 0 : index
      %c0_252 = arith.constant 0 : index
      %401 = vector.load %arg10[%c0_251, %c0_252] : memref<32x128xf32, #tpu.memory_space<vmem>>, vector<8x48xf32>
      tpu.vector_store %arg10[%c0_251, %c0_252], %400 {strides = array<i32>} : memref<32x128xf32, #tpu.memory_space<vmem>>, vector<8x48xf32>,
    } else {
    }
    %c0_i32_14 = arith.constant 0 : i32
    %13 = arith.cmpi slt, %arg1, %c0_i32_14 : i32
    %14 = arith.extui %13 : i1 to i32
    %c0_i32_15 = arith.constant 0 : i32
    %15 = arith.cmpi ne, %14, %c0_i32_15 : i32
    scf.if %15 {
      %c0_243 = arith.constant 0 : index
      %c0_244 = arith.constant 0 : index
      %c0_245 = arith.constant 0 : index
      %396 = vector.load %arg4[%c0_243, %c0_244, %c0_245] : memref<1x8x48xf32, #tpu.memory_space<vmem>>, vector<1x8x48xf32>
      %397 = vector.shape_cast %396 : vector<1x8x48xf32> to vector<8x48xf32>
      %c24 = arith.constant 24 : index
      %c0_246 = arith.constant 0 : index
      %398 = vector.load %arg9[%c24, %c0_246] : memref<32x128xf32, #tpu.memory_space<vmem>>, vector<8x48xf32>
      tpu.vector_store %arg9[%c24, %c0_246], %397 {strides = array<i32>} : memref<32x128xf32, #tpu.memory_space<vmem>>, vector<8x48xf32>,
      %c0_247 = arith.constant 0 : index
      %c0_248 = arith.constant 0 : index
      %c0_249 = arith.constant 0 : index
      %399 = vector.load %arg7[%c0_247, %c0_248, %c0_249] : memref<1x8x48xf32, #tpu.memory_space<vmem>>, vector<1x8x48xf32>
      %400 = vector.shape_cast %399 : vector<1x8x48xf32> to vector<8x48xf32>
      %c24_250 = arith.constant 24 : index
      %c0_251 = arith.constant 0 : index
      %401 = vector.load %arg10[%c24_250, %c0_251] : memref<32x128xf32, #tpu.memory_space<vmem>>, vector<8x48xf32>
      tpu.vector_store %arg10[%c24_250, %c0_251], %400 {strides = array<i32>} : memref<32x128xf32, #tpu.memory_space<vmem>>, vector<8x48xf32>,
    } else {
    }
    %c0_16 = arith.constant 0 : index
    %c0_17 = arith.constant 0 : index
    %16 = vector.load %arg9[%c0_16, %c0_17] : memref<32x128xf32, #tpu.memory_space<vmem>>, vector<32x128xf32>
    %c0_18 = arith.constant 0 : index
    %c0_19 = arith.constant 0 : index
    %17 = vector.load %arg10[%c0_18, %c0_19] : memref<32x128xf32, #tpu.memory_space<vmem>>, vector<32x128xf32>
    %18 = arith.mulf %16, %16 : vector<32x128xf32>
    %c0_20 = arith.constant 0 : index
    %c0_21 = arith.constant 0 : index
    %19 = vector.load %arg11[%c0_20, %c0_21] : memref<32x128xf32, #tpu.memory_space<vmem>>, vector<32x128xf32>
    tpu.vector_store %arg11[%c0_20, %c0_21], %18 {strides = array<i32>} : memref<32x128xf32, #tpu.memory_space<vmem>>, vector<32x128xf32>,
    %20 = arith.mulf %17, %17 : vector<32x128xf32>
    %c0_22 = arith.constant 0 : index
    %c0_23 = arith.constant 0 : index
    %21 = vector.load %arg12[%c0_22, %c0_23] : memref<32x128xf32, #tpu.memory_space<vmem>>, vector<32x128xf32>
    tpu.vector_store %arg12[%c0_22, %c0_23], %20 {strides = array<i32>} : memref<32x128xf32, #tpu.memory_space<vmem>>, vector<32x128xf32>,
    %22 = arith.mulf %16, %17 : vector<32x128xf32>
    %c0_24 = arith.constant 0 : index
    %c0_25 = arith.constant 0 : index
    %23 = vector.load %arg13[%c0_24, %c0_25] : memref<32x128xf32, #tpu.memory_space<vmem>>, vector<32x128xf32>
    tpu.vector_store %arg13[%c0_24, %c0_25], %22 {strides = array<i32>} : memref<32x128xf32, #tpu.memory_space<vmem>>, vector<32x128xf32>,
    %24 = vector.extract_strided_slice %16 {offsets = [8, 0], sizes = [16, 128], strides = [1, 1]} : vector<32x128xf32> to vector<16x128xf32>
    %25 = vector.extract_strided_slice %17 {offsets = [8, 0], sizes = [16, 128], strides = [1, 1]} : vector<32x128xf32> to vector<16x128xf32>
    %26 = arith.subf %24, %25 : vector<16x128xf32>
    %27 = math.absf %26 : vector<16x128xf32>
    %cst_26 = arith.constant dense<0.000000e+00> : vector<128xf32>
    %28 = vector.multi_reduction <add>, %27, %cst_26 [0] : vector<16x128xf32> to vector<128xf32>
    %29 = vector.shape_cast %28 : vector<128xf32> to vector<1x128xf32>
    %c8_27 = arith.constant 8 : index
    %c0_28 = arith.constant 0 : index
    %30 = vector.load %arg9[%c8_27, %c0_28] : memref<32x128xf32, #tpu.memory_space<vmem>>, vector<16x128xf32>
    %cst_29 = arith.constant 0.266011715 : f32
    %31 = vector.broadcast %cst_29 : f32 to vector<16x128xf32>
    %32 = arith.mulf %31, %30 : vector<16x128xf32>
    %c3 = arith.constant 3 : index
    %c0_30 = arith.constant 0 : index
    %33 = vector.load %arg9[%c3, %c0_30] : memref<32x128xf32, #tpu.memory_space<vmem>>, vector<16x128xf32>
    %c13 = arith.constant 13 : index
    %c0_31 = arith.constant 0 : index
    %34 = vector.load %arg9[%c13, %c0_31] : memref<32x128xf32, #tpu.memory_space<vmem>>, vector<16x128xf32>
    %35 = arith.addf %33, %34 : vector<16x128xf32>
    %cst_32 = arith.constant 0.00102838012 : f32
    %36 = vector.broadcast %cst_32 : f32 to vector<16x128xf32>
    %37 = arith.mulf %36, %35 : vector<16x128xf32>
    %38 = arith.addf %32, %37 : vector<16x128xf32>
    %c4 = arith.constant 4 : index
    %c0_33 = arith.constant 0 : index
    %39 = vector.load %arg9[%c4, %c0_33] : memref<32x128xf32, #tpu.memory_space<vmem>>, vector<16x128xf32>
    %c12 = arith.constant 12 : index
    %c0_34 = arith.constant 0 : index
    %40 = vector.load %arg9[%c12, %c0_34] : memref<32x128xf32, #tpu.memory_space<vmem>>, vector<16x128xf32>
    %41 = arith.addf %39, %40 : vector<16x128xf32>
    %cst_35 = arith.constant 0.00759875821 : f32
    %42 = vector.broadcast %cst_35 : f32 to vector<16x128xf32>
    %43 = arith.mulf %42, %41 : vector<16x128xf32>
    %44 = arith.addf %38, %43 : vector<16x128xf32>
    %c5 = arith.constant 5 : index
    %c0_36 = arith.constant 0 : index
    %45 = vector.load %arg9[%c5, %c0_36] : memref<32x128xf32, #tpu.memory_space<vmem>>, vector<16x128xf32>
    %c11 = arith.constant 11 : index
    %c0_37 = arith.constant 0 : index
    %46 = vector.load %arg9[%c11, %c0_37] : memref<32x128xf32, #tpu.memory_space<vmem>>, vector<16x128xf32>
    %47 = arith.addf %45, %46 : vector<16x128xf32>
    %cst_38 = arith.constant 0.0360007733 : f32
    %48 = vector.broadcast %cst_38 : f32 to vector<16x128xf32>
    %49 = arith.mulf %48, %47 : vector<16x128xf32>
    %50 = arith.addf %44, %49 : vector<16x128xf32>
    %c6 = arith.constant 6 : index
    %c0_39 = arith.constant 0 : index
    %51 = vector.load %arg9[%c6, %c0_39] : memref<32x128xf32, #tpu.memory_space<vmem>>, vector<16x128xf32>
    %c10 = arith.constant 10 : index
    %c0_40 = arith.constant 0 : index
    %52 = vector.load %arg9[%c10, %c0_40] : memref<32x128xf32, #tpu.memory_space<vmem>>, vector<16x128xf32>
    %53 = arith.addf %51, %52 : vector<16x128xf32>
    %cst_41 = arith.constant 0.109360687 : f32
    %54 = vector.broadcast %cst_41 : f32 to vector<16x128xf32>
    %55 = arith.mulf %54, %53 : vector<16x128xf32>
    %56 = arith.addf %50, %55 : vector<16x128xf32>
    %c7 = arith.constant 7 : index
    %c0_42 = arith.constant 0 : index
    %57 = vector.load %arg9[%c7, %c0_42] : memref<32x128xf32, #tpu.memory_space<vmem>>, vector<16x128xf32>
    %c9 = arith.constant 9 : index
    %c0_43 = arith.constant 0 : index
    %58 = vector.load %arg9[%c9, %c0_43] : memref<32x128xf32, #tpu.memory_space<vmem>>, vector<16x128xf32>
    %59 = arith.addf %57, %58 : vector<16x128xf32>
    %cst_44 = arith.constant 0.213005543 : f32
    %60 = vector.broadcast %cst_44 : f32 to vector<16x128xf32>
    %61 = arith.mulf %60, %59 : vector<16x128xf32>
    %62 = arith.addf %56, %61 : vector<16x128xf32>
    %cst_45 = arith.constant 0.266011715 : f32
    %63 = vector.broadcast %cst_45 : f32 to vector<16x128xf32>
    %64 = arith.mulf %63, %62 : vector<16x128xf32>
    %c15_i32 = arith.constant 15 : i32
    %65 = tpu.dynamic_rotate %62 by %c15_i32 dim 1 : vector<16x128xf32>, i32 -> vector<16x128xf32>
    %c113_i32 = arith.constant 113 : i32
    %66 = tpu.dynamic_rotate %62 by %c113_i32 dim 1 : vector<16x128xf32>, i32 -> vector<16x128xf32>
    %67 = arith.addf %65, %66 : vector<16x128xf32>
    %cst_46 = arith.constant 0.00102838012 : f32
    %68 = vector.broadcast %cst_46 : f32 to vector<16x128xf32>
    %69 = arith.mulf %68, %67 : vector<16x128xf32>
    %70 = arith.addf %64, %69 : vector<16x128xf32>
    %c12_i32 = arith.constant 12 : i32
    %71 = tpu.dynamic_rotate %62 by %c12_i32 dim 1 : vector<16x128xf32>, i32 -> vector<16x128xf32>
    %c116_i32 = arith.constant 116 : i32
    %72 = tpu.dynamic_rotate %62 by %c116_i32 dim 1 : vector<16x128xf32>, i32 -> vector<16x128xf32>
    %73 = arith.addf %71, %72 : vector<16x128xf32>
    %cst_47 = arith.constant 0.00759875821 : f32
    %74 = vector.broadcast %cst_47 : f32 to vector<16x128xf32>
    %75 = arith.mulf %74, %73 : vector<16x128xf32>
    %76 = arith.addf %70, %75 : vector<16x128xf32>
    %c9_i32 = arith.constant 9 : i32
    %77 = tpu.dynamic_rotate %62 by %c9_i32 dim 1 : vector<16x128xf32>, i32 -> vector<16x128xf32>
    %c119_i32 = arith.constant 119 : i32
    %78 = tpu.dynamic_rotate %62 by %c119_i32 dim 1 : vector<16x128xf32>, i32 -> vector<16x128xf32>
    %79 = arith.addf %77, %78 : vector<16x128xf32>
    %cst_48 = arith.constant 0.0360007733 : f32
    %80 = vector.broadcast %cst_48 : f32 to vector<16x128xf32>
    %81 = arith.mulf %80, %79 : vector<16x128xf32>
    %82 = arith.addf %76, %81 : vector<16x128xf32>
    %c6_i32 = arith.constant 6 : i32
    %83 = tpu.dynamic_rotate %62 by %c6_i32 dim 1 : vector<16x128xf32>, i32 -> vector<16x128xf32>
    %c122_i32 = arith.constant 122 : i32
    %84 = tpu.dynamic_rotate %62 by %c122_i32 dim 1 : vector<16x128xf32>, i32 -> vector<16x128xf32>
    %85 = arith.addf %83, %84 : vector<16x128xf32>
    %cst_49 = arith.constant 0.109360687 : f32
    %86 = vector.broadcast %cst_49 : f32 to vector<16x128xf32>
    %87 = arith.mulf %86, %85 : vector<16x128xf32>
    %88 = arith.addf %82, %87 : vector<16x128xf32>
    %c3_i32 = arith.constant 3 : i32
    %89 = tpu.dynamic_rotate %62 by %c3_i32 dim 1 : vector<16x128xf32>, i32 -> vector<16x128xf32>
    %c125_i32 = arith.constant 125 : i32
    %90 = tpu.dynamic_rotate %62 by %c125_i32 dim 1 : vector<16x128xf32>, i32 -> vector<16x128xf32>
    %91 = arith.addf %89, %90 : vector<16x128xf32>
    %cst_50 = arith.constant 0.213005543 : f32
    %92 = vector.broadcast %cst_50 : f32 to vector<16x128xf32>
    %93 = arith.mulf %92, %91 : vector<16x128xf32>
    %94 = arith.addf %88, %93 : vector<16x128xf32>
    %95 = arith.mulf %94, %94 : vector<16x128xf32>
    %c8_51 = arith.constant 8 : index
    %c0_52 = arith.constant 0 : index
    %96 = vector.load %arg10[%c8_51, %c0_52] : memref<32x128xf32, #tpu.memory_space<vmem>>, vector<16x128xf32>
    %cst_53 = arith.constant 0.266011715 : f32
    %97 = vector.broadcast %cst_53 : f32 to vector<16x128xf32>
    %98 = arith.mulf %97, %96 : vector<16x128xf32>
    %c3_54 = arith.constant 3 : index
    %c0_55 = arith.constant 0 : index
    %99 = vector.load %arg10[%c3_54, %c0_55] : memref<32x128xf32, #tpu.memory_space<vmem>>, vector<16x128xf32>
    %c13_56 = arith.constant 13 : index
    %c0_57 = arith.constant 0 : index
    %100 = vector.load %arg10[%c13_56, %c0_57] : memref<32x128xf32, #tpu.memory_space<vmem>>, vector<16x128xf32>
    %101 = arith.addf %99, %100 : vector<16x128xf32>
    %cst_58 = arith.constant 0.00102838012 : f32
    %102 = vector.broadcast %cst_58 : f32 to vector<16x128xf32>
    %103 = arith.mulf %102, %101 : vector<16x128xf32>
    %104 = arith.addf %98, %103 : vector<16x128xf32>
    %c4_59 = arith.constant 4 : index
    %c0_60 = arith.constant 0 : index
    %105 = vector.load %arg10[%c4_59, %c0_60] : memref<32x128xf32, #tpu.memory_space<vmem>>, vector<16x128xf32>
    %c12_61 = arith.constant 12 : index
    %c0_62 = arith.constant 0 : index
    %106 = vector.load %arg10[%c12_61, %c0_62] : memref<32x128xf32, #tpu.memory_space<vmem>>, vector<16x128xf32>
    %107 = arith.addf %105, %106 : vector<16x128xf32>
    %cst_63 = arith.constant 0.00759875821 : f32
    %108 = vector.broadcast %cst_63 : f32 to vector<16x128xf32>
    %109 = arith.mulf %108, %107 : vector<16x128xf32>
    %110 = arith.addf %104, %109 : vector<16x128xf32>
    %c5_64 = arith.constant 5 : index
    %c0_65 = arith.constant 0 : index
    %111 = vector.load %arg10[%c5_64, %c0_65] : memref<32x128xf32, #tpu.memory_space<vmem>>, vector<16x128xf32>
    %c11_66 = arith.constant 11 : index
    %c0_67 = arith.constant 0 : index
    %112 = vector.load %arg10[%c11_66, %c0_67] : memref<32x128xf32, #tpu.memory_space<vmem>>, vector<16x128xf32>
    %113 = arith.addf %111, %112 : vector<16x128xf32>
    %cst_68 = arith.constant 0.0360007733 : f32
    %114 = vector.broadcast %cst_68 : f32 to vector<16x128xf32>
    %115 = arith.mulf %114, %113 : vector<16x128xf32>
    %116 = arith.addf %110, %115 : vector<16x128xf32>
    %c6_69 = arith.constant 6 : index
    %c0_70 = arith.constant 0 : index
    %117 = vector.load %arg10[%c6_69, %c0_70] : memref<32x128xf32, #tpu.memory_space<vmem>>, vector<16x128xf32>
    %c10_71 = arith.constant 10 : index
    %c0_72 = arith.constant 0 : index
    %118 = vector.load %arg10[%c10_71, %c0_72] : memref<32x128xf32, #tpu.memory_space<vmem>>, vector<16x128xf32>
    %119 = arith.addf %117, %118 : vector<16x128xf32>
    %cst_73 = arith.constant 0.109360687 : f32
    %120 = vector.broadcast %cst_73 : f32 to vector<16x128xf32>
    %121 = arith.mulf %120, %119 : vector<16x128xf32>
    %122 = arith.addf %116, %121 : vector<16x128xf32>
    %c7_74 = arith.constant 7 : index
    %c0_75 = arith.constant 0 : index
    %123 = vector.load %arg10[%c7_74, %c0_75] : memref<32x128xf32, #tpu.memory_space<vmem>>, vector<16x128xf32>
    %c9_76 = arith.constant 9 : index
    %c0_77 = arith.constant 0 : index
    %124 = vector.load %arg10[%c9_76, %c0_77] : memref<32x128xf32, #tpu.memory_space<vmem>>, vector<16x128xf32>
    %125 = arith.addf %123, %124 : vector<16x128xf32>
    %cst_78 = arith.constant 0.213005543 : f32
    %126 = vector.broadcast %cst_78 : f32 to vector<16x128xf32>
    %127 = arith.mulf %126, %125 : vector<16x128xf32>
    %128 = arith.addf %122, %127 : vector<16x128xf32>
    %cst_79 = arith.constant 0.266011715 : f32
    %129 = vector.broadcast %cst_79 : f32 to vector<16x128xf32>
    %130 = arith.mulf %129, %128 : vector<16x128xf32>
    %c15_i32_80 = arith.constant 15 : i32
    %131 = tpu.dynamic_rotate %128 by %c15_i32_80 dim 1 : vector<16x128xf32>, i32 -> vector<16x128xf32>
    %c113_i32_81 = arith.constant 113 : i32
    %132 = tpu.dynamic_rotate %128 by %c113_i32_81 dim 1 : vector<16x128xf32>, i32 -> vector<16x128xf32>
    %133 = arith.addf %131, %132 : vector<16x128xf32>
    %cst_82 = arith.constant 0.00102838012 : f32
    %134 = vector.broadcast %cst_82 : f32 to vector<16x128xf32>
    %135 = arith.mulf %134, %133 : vector<16x128xf32>
    %136 = arith.addf %130, %135 : vector<16x128xf32>
    %c12_i32_83 = arith.constant 12 : i32
    %137 = tpu.dynamic_rotate %128 by %c12_i32_83 dim 1 : vector<16x128xf32>, i32 -> vector<16x128xf32>
    %c116_i32_84 = arith.constant 116 : i32
    %138 = tpu.dynamic_rotate %128 by %c116_i32_84 dim 1 : vector<16x128xf32>, i32 -> vector<16x128xf32>
    %139 = arith.addf %137, %138 : vector<16x128xf32>
    %cst_85 = arith.constant 0.00759875821 : f32
    %140 = vector.broadcast %cst_85 : f32 to vector<16x128xf32>
    %141 = arith.mulf %140, %139 : vector<16x128xf32>
    %142 = arith.addf %136, %141 : vector<16x128xf32>
    %c9_i32_86 = arith.constant 9 : i32
    %143 = tpu.dynamic_rotate %128 by %c9_i32_86 dim 1 : vector<16x128xf32>, i32 -> vector<16x128xf32>
    %c119_i32_87 = arith.constant 119 : i32
    %144 = tpu.dynamic_rotate %128 by %c119_i32_87 dim 1 : vector<16x128xf32>, i32 -> vector<16x128xf32>
    %145 = arith.addf %143, %144 : vector<16x128xf32>
    %cst_88 = arith.constant 0.0360007733 : f32
    %146 = vector.broadcast %cst_88 : f32 to vector<16x128xf32>
    %147 = arith.mulf %146, %145 : vector<16x128xf32>
    %148 = arith.addf %142, %147 : vector<16x128xf32>
    %c6_i32_89 = arith.constant 6 : i32
    %149 = tpu.dynamic_rotate %128 by %c6_i32_89 dim 1 : vector<16x128xf32>, i32 -> vector<16x128xf32>
    %c122_i32_90 = arith.constant 122 : i32
    %150 = tpu.dynamic_rotate %128 by %c122_i32_90 dim 1 : vector<16x128xf32>, i32 -> vector<16x128xf32>
    %151 = arith.addf %149, %150 : vector<16x128xf32>
    %cst_91 = arith.constant 0.109360687 : f32
    %152 = vector.broadcast %cst_91 : f32 to vector<16x128xf32>
    %153 = arith.mulf %152, %151 : vector<16x128xf32>
    %154 = arith.addf %148, %153 : vector<16x128xf32>
    %c3_i32_92 = arith.constant 3 : i32
    %155 = tpu.dynamic_rotate %128 by %c3_i32_92 dim 1 : vector<16x128xf32>, i32 -> vector<16x128xf32>
    %c125_i32_93 = arith.constant 125 : i32
    %156 = tpu.dynamic_rotate %128 by %c125_i32_93 dim 1 : vector<16x128xf32>, i32 -> vector<16x128xf32>
    %157 = arith.addf %155, %156 : vector<16x128xf32>
    %cst_94 = arith.constant 0.213005543 : f32
    %158 = vector.broadcast %cst_94 : f32 to vector<16x128xf32>
    %159 = arith.mulf %158, %157 : vector<16x128xf32>
    %160 = arith.addf %154, %159 : vector<16x128xf32>
    %161 = arith.mulf %160, %160 : vector<16x128xf32>
    %162 = arith.mulf %94, %160 : vector<16x128xf32>
    %163 = arith.addf %95, %161 : vector<16x128xf32>
    %cst_95 = arith.constant 9.99999974E-5 : f32
    %164 = vector.broadcast %cst_95 : f32 to vector<16x128xf32>
    %165 = arith.addf %163, %164 : vector<16x128xf32>
    %cst_96 = arith.constant 2.000000e+00 : f32
    %166 = vector.broadcast %cst_96 : f32 to vector<16x128xf32>
    %167 = arith.mulf %166, %162 : vector<16x128xf32>
    %cst_97 = arith.constant 9.99999974E-5 : f32
    %168 = vector.broadcast %cst_97 : f32 to vector<16x128xf32>
    %169 = arith.addf %167, %168 : vector<16x128xf32>
    %c8_98 = arith.constant 8 : index
    %c0_99 = arith.constant 0 : index
    %170 = vector.load %arg11[%c8_98, %c0_99] : memref<32x128xf32, #tpu.memory_space<vmem>>, vector<16x128xf32>
    %cst_100 = arith.constant 0.266011715 : f32
    %171 = vector.broadcast %cst_100 : f32 to vector<16x128xf32>
    %172 = arith.mulf %171, %170 : vector<16x128xf32>
    %c3_101 = arith.constant 3 : index
    %c0_102 = arith.constant 0 : index
    %173 = vector.load %arg11[%c3_101, %c0_102] : memref<32x128xf32, #tpu.memory_space<vmem>>, vector<16x128xf32>
    %c13_103 = arith.constant 13 : index
    %c0_104 = arith.constant 0 : index
    %174 = vector.load %arg11[%c13_103, %c0_104] : memref<32x128xf32, #tpu.memory_space<vmem>>, vector<16x128xf32>
    %175 = arith.addf %173, %174 : vector<16x128xf32>
    %cst_105 = arith.constant 0.00102838012 : f32
    %176 = vector.broadcast %cst_105 : f32 to vector<16x128xf32>
    %177 = arith.mulf %176, %175 : vector<16x128xf32>
    %178 = arith.addf %172, %177 : vector<16x128xf32>
    %c4_106 = arith.constant 4 : index
    %c0_107 = arith.constant 0 : index
    %179 = vector.load %arg11[%c4_106, %c0_107] : memref<32x128xf32, #tpu.memory_space<vmem>>, vector<16x128xf32>
    %c12_108 = arith.constant 12 : index
    %c0_109 = arith.constant 0 : index
    %180 = vector.load %arg11[%c12_108, %c0_109] : memref<32x128xf32, #tpu.memory_space<vmem>>, vector<16x128xf32>
    %181 = arith.addf %179, %180 : vector<16x128xf32>
    %cst_110 = arith.constant 0.00759875821 : f32
    %182 = vector.broadcast %cst_110 : f32 to vector<16x128xf32>
    %183 = arith.mulf %182, %181 : vector<16x128xf32>
    %184 = arith.addf %178, %183 : vector<16x128xf32>
    %c5_111 = arith.constant 5 : index
    %c0_112 = arith.constant 0 : index
    %185 = vector.load %arg11[%c5_111, %c0_112] : memref<32x128xf32, #tpu.memory_space<vmem>>, vector<16x128xf32>
    %c11_113 = arith.constant 11 : index
    %c0_114 = arith.constant 0 : index
    %186 = vector.load %arg11[%c11_113, %c0_114] : memref<32x128xf32, #tpu.memory_space<vmem>>, vector<16x128xf32>
    %187 = arith.addf %185, %186 : vector<16x128xf32>
    %cst_115 = arith.constant 0.0360007733 : f32
    %188 = vector.broadcast %cst_115 : f32 to vector<16x128xf32>
    %189 = arith.mulf %188, %187 : vector<16x128xf32>
    %190 = arith.addf %184, %189 : vector<16x128xf32>
    %c6_116 = arith.constant 6 : index
    %c0_117 = arith.constant 0 : index
    %191 = vector.load %arg11[%c6_116, %c0_117] : memref<32x128xf32, #tpu.memory_space<vmem>>, vector<16x128xf32>
    %c10_118 = arith.constant 10 : index
    %c0_119 = arith.constant 0 : index
    %192 = vector.load %arg11[%c10_118, %c0_119] : memref<32x128xf32, #tpu.memory_space<vmem>>, vector<16x128xf32>
    %193 = arith.addf %191, %192 : vector<16x128xf32>
    %cst_120 = arith.constant 0.109360687 : f32
    %194 = vector.broadcast %cst_120 : f32 to vector<16x128xf32>
    %195 = arith.mulf %194, %193 : vector<16x128xf32>
    %196 = arith.addf %190, %195 : vector<16x128xf32>
    %c7_121 = arith.constant 7 : index
    %c0_122 = arith.constant 0 : index
    %197 = vector.load %arg11[%c7_121, %c0_122] : memref<32x128xf32, #tpu.memory_space<vmem>>, vector<16x128xf32>
    %c9_123 = arith.constant 9 : index
    %c0_124 = arith.constant 0 : index
    %198 = vector.load %arg11[%c9_123, %c0_124] : memref<32x128xf32, #tpu.memory_space<vmem>>, vector<16x128xf32>
    %199 = arith.addf %197, %198 : vector<16x128xf32>
    %cst_125 = arith.constant 0.213005543 : f32
    %200 = vector.broadcast %cst_125 : f32 to vector<16x128xf32>
    %201 = arith.mulf %200, %199 : vector<16x128xf32>
    %202 = arith.addf %196, %201 : vector<16x128xf32>
    %cst_126 = arith.constant 0.266011715 : f32
    %203 = vector.broadcast %cst_126 : f32 to vector<16x128xf32>
    %204 = arith.mulf %203, %202 : vector<16x128xf32>
    %c15_i32_127 = arith.constant 15 : i32
    %205 = tpu.dynamic_rotate %202 by %c15_i32_127 dim 1 : vector<16x128xf32>, i32 -> vector<16x128xf32>
    %c113_i32_128 = arith.constant 113 : i32
    %206 = tpu.dynamic_rotate %202 by %c113_i32_128 dim 1 : vector<16x128xf32>, i32 -> vector<16x128xf32>
    %207 = arith.addf %205, %206 : vector<16x128xf32>
    %cst_129 = arith.constant 0.00102838012 : f32
    %208 = vector.broadcast %cst_129 : f32 to vector<16x128xf32>
    %209 = arith.mulf %208, %207 : vector<16x128xf32>
    %210 = arith.addf %204, %209 : vector<16x128xf32>
    %c12_i32_130 = arith.constant 12 : i32
    %211 = tpu.dynamic_rotate %202 by %c12_i32_130 dim 1 : vector<16x128xf32>, i32 -> vector<16x128xf32>
    %c116_i32_131 = arith.constant 116 : i32
    %212 = tpu.dynamic_rotate %202 by %c116_i32_131 dim 1 : vector<16x128xf32>, i32 -> vector<16x128xf32>
    %213 = arith.addf %211, %212 : vector<16x128xf32>
    %cst_132 = arith.constant 0.00759875821 : f32
    %214 = vector.broadcast %cst_132 : f32 to vector<16x128xf32>
    %215 = arith.mulf %214, %213 : vector<16x128xf32>
    %216 = arith.addf %210, %215 : vector<16x128xf32>
    %c9_i32_133 = arith.constant 9 : i32
    %217 = tpu.dynamic_rotate %202 by %c9_i32_133 dim 1 : vector<16x128xf32>, i32 -> vector<16x128xf32>
    %c119_i32_134 = arith.constant 119 : i32
    %218 = tpu.dynamic_rotate %202 by %c119_i32_134 dim 1 : vector<16x128xf32>, i32 -> vector<16x128xf32>
    %219 = arith.addf %217, %218 : vector<16x128xf32>
    %cst_135 = arith.constant 0.0360007733 : f32
    %220 = vector.broadcast %cst_135 : f32 to vector<16x128xf32>
    %221 = arith.mulf %220, %219 : vector<16x128xf32>
    %222 = arith.addf %216, %221 : vector<16x128xf32>
    %c6_i32_136 = arith.constant 6 : i32
    %223 = tpu.dynamic_rotate %202 by %c6_i32_136 dim 1 : vector<16x128xf32>, i32 -> vector<16x128xf32>
    %c122_i32_137 = arith.constant 122 : i32
    %224 = tpu.dynamic_rotate %202 by %c122_i32_137 dim 1 : vector<16x128xf32>, i32 -> vector<16x128xf32>
    %225 = arith.addf %223, %224 : vector<16x128xf32>
    %cst_138 = arith.constant 0.109360687 : f32
    %226 = vector.broadcast %cst_138 : f32 to vector<16x128xf32>
    %227 = arith.mulf %226, %225 : vector<16x128xf32>
    %228 = arith.addf %222, %227 : vector<16x128xf32>
    %c3_i32_139 = arith.constant 3 : i32
    %229 = tpu.dynamic_rotate %202 by %c3_i32_139 dim 1 : vector<16x128xf32>, i32 -> vector<16x128xf32>
    %c125_i32_140 = arith.constant 125 : i32
    %230 = tpu.dynamic_rotate %202 by %c125_i32_140 dim 1 : vector<16x128xf32>, i32 -> vector<16x128xf32>
    %231 = arith.addf %229, %230 : vector<16x128xf32>
    %cst_141 = arith.constant 0.213005543 : f32
    %232 = vector.broadcast %cst_141 : f32 to vector<16x128xf32>
    %233 = arith.mulf %232, %231 : vector<16x128xf32>
    %234 = arith.addf %228, %233 : vector<16x128xf32>
    %235 = arith.subf %234, %95 : vector<16x128xf32>
    %c8_142 = arith.constant 8 : index
    %c0_143 = arith.constant 0 : index
    %236 = vector.load %arg12[%c8_142, %c0_143] : memref<32x128xf32, #tpu.memory_space<vmem>>, vector<16x128xf32>
    %cst_144 = arith.constant 0.266011715 : f32
    %237 = vector.broadcast %cst_144 : f32 to vector<16x128xf32>
    %238 = arith.mulf %237, %236 : vector<16x128xf32>
    %c3_145 = arith.constant 3 : index
    %c0_146 = arith.constant 0 : index
    %239 = vector.load %arg12[%c3_145, %c0_146] : memref<32x128xf32, #tpu.memory_space<vmem>>, vector<16x128xf32>
    %c13_147 = arith.constant 13 : index
    %c0_148 = arith.constant 0 : index
    %240 = vector.load %arg12[%c13_147, %c0_148] : memref<32x128xf32, #tpu.memory_space<vmem>>, vector<16x128xf32>
    %241 = arith.addf %239, %240 : vector<16x128xf32>
    %cst_149 = arith.constant 0.00102838012 : f32
    %242 = vector.broadcast %cst_149 : f32 to vector<16x128xf32>
    %243 = arith.mulf %242, %241 : vector<16x128xf32>
    %244 = arith.addf %238, %243 : vector<16x128xf32>
    %c4_150 = arith.constant 4 : index
    %c0_151 = arith.constant 0 : index
    %245 = vector.load %arg12[%c4_150, %c0_151] : memref<32x128xf32, #tpu.memory_space<vmem>>, vector<16x128xf32>
    %c12_152 = arith.constant 12 : index
    %c0_153 = arith.constant 0 : index
    %246 = vector.load %arg12[%c12_152, %c0_153] : memref<32x128xf32, #tpu.memory_space<vmem>>, vector<16x128xf32>
    %247 = arith.addf %245, %246 : vector<16x128xf32>
    %cst_154 = arith.constant 0.00759875821 : f32
    %248 = vector.broadcast %cst_154 : f32 to vector<16x128xf32>
    %249 = arith.mulf %248, %247 : vector<16x128xf32>
    %250 = arith.addf %244, %249 : vector<16x128xf32>
    %c5_155 = arith.constant 5 : index
    %c0_156 = arith.constant 0 : index
    %251 = vector.load %arg12[%c5_155, %c0_156] : memref<32x128xf32, #tpu.memory_space<vmem>>, vector<16x128xf32>
    %c11_157 = arith.constant 11 : index
    %c0_158 = arith.constant 0 : index
    %252 = vector.load %arg12[%c11_157, %c0_158] : memref<32x128xf32, #tpu.memory_space<vmem>>, vector<16x128xf32>
    %253 = arith.addf %251, %252 : vector<16x128xf32>
    %cst_159 = arith.constant 0.0360007733 : f32
    %254 = vector.broadcast %cst_159 : f32 to vector<16x128xf32>
    %255 = arith.mulf %254, %253 : vector<16x128xf32>
    %256 = arith.addf %250, %255 : vector<16x128xf32>
    %c6_160 = arith.constant 6 : index
    %c0_161 = arith.constant 0 : index
    %257 = vector.load %arg12[%c6_160, %c0_161] : memref<32x128xf32, #tpu.memory_space<vmem>>, vector<16x128xf32>
    %c10_162 = arith.constant 10 : index
    %c0_163 = arith.constant 0 : index
    %258 = vector.load %arg12[%c10_162, %c0_163] : memref<32x128xf32, #tpu.memory_space<vmem>>, vector<16x128xf32>
    %259 = arith.addf %257, %258 : vector<16x128xf32>
    %cst_164 = arith.constant 0.109360687 : f32
    %260 = vector.broadcast %cst_164 : f32 to vector<16x128xf32>
    %261 = arith.mulf %260, %259 : vector<16x128xf32>
    %262 = arith.addf %256, %261 : vector<16x128xf32>
    %c7_165 = arith.constant 7 : index
    %c0_166 = arith.constant 0 : index
    %263 = vector.load %arg12[%c7_165, %c0_166] : memref<32x128xf32, #tpu.memory_space<vmem>>, vector<16x128xf32>
    %c9_167 = arith.constant 9 : index
    %c0_168 = arith.constant 0 : index
    %264 = vector.load %arg12[%c9_167, %c0_168] : memref<32x128xf32, #tpu.memory_space<vmem>>, vector<16x128xf32>
    %265 = arith.addf %263, %264 : vector<16x128xf32>
    %cst_169 = arith.constant 0.213005543 : f32
    %266 = vector.broadcast %cst_169 : f32 to vector<16x128xf32>
    %267 = arith.mulf %266, %265 : vector<16x128xf32>
    %268 = arith.addf %262, %267 : vector<16x128xf32>
    %cst_170 = arith.constant 0.266011715 : f32
    %269 = vector.broadcast %cst_170 : f32 to vector<16x128xf32>
    %270 = arith.mulf %269, %268 : vector<16x128xf32>
    %c15_i32_171 = arith.constant 15 : i32
    %271 = tpu.dynamic_rotate %268 by %c15_i32_171 dim 1 : vector<16x128xf32>, i32 -> vector<16x128xf32>
    %c113_i32_172 = arith.constant 113 : i32
    %272 = tpu.dynamic_rotate %268 by %c113_i32_172 dim 1 : vector<16x128xf32>, i32 -> vector<16x128xf32>
    %273 = arith.addf %271, %272 : vector<16x128xf32>
    %cst_173 = arith.constant 0.00102838012 : f32
    %274 = vector.broadcast %cst_173 : f32 to vector<16x128xf32>
    %275 = arith.mulf %274, %273 : vector<16x128xf32>
    %276 = arith.addf %270, %275 : vector<16x128xf32>
    %c12_i32_174 = arith.constant 12 : i32
    %277 = tpu.dynamic_rotate %268 by %c12_i32_174 dim 1 : vector<16x128xf32>, i32 -> vector<16x128xf32>
    %c116_i32_175 = arith.constant 116 : i32
    %278 = tpu.dynamic_rotate %268 by %c116_i32_175 dim 1 : vector<16x128xf32>, i32 -> vector<16x128xf32>
    %279 = arith.addf %277, %278 : vector<16x128xf32>
    %cst_176 = arith.constant 0.00759875821 : f32
    %280 = vector.broadcast %cst_176 : f32 to vector<16x128xf32>
    %281 = arith.mulf %280, %279 : vector<16x128xf32>
    %282 = arith.addf %276, %281 : vector<16x128xf32>
    %c9_i32_177 = arith.constant 9 : i32
    %283 = tpu.dynamic_rotate %268 by %c9_i32_177 dim 1 : vector<16x128xf32>, i32 -> vector<16x128xf32>
    %c119_i32_178 = arith.constant 119 : i32
    %284 = tpu.dynamic_rotate %268 by %c119_i32_178 dim 1 : vector<16x128xf32>, i32 -> vector<16x128xf32>
    %285 = arith.addf %283, %284 : vector<16x128xf32>
    %cst_179 = arith.constant 0.0360007733 : f32
    %286 = vector.broadcast %cst_179 : f32 to vector<16x128xf32>
    %287 = arith.mulf %286, %285 : vector<16x128xf32>
    %288 = arith.addf %282, %287 : vector<16x128xf32>
    %c6_i32_180 = arith.constant 6 : i32
    %289 = tpu.dynamic_rotate %268 by %c6_i32_180 dim 1 : vector<16x128xf32>, i32 -> vector<16x128xf32>
    %c122_i32_181 = arith.constant 122 : i32
    %290 = tpu.dynamic_rotate %268 by %c122_i32_181 dim 1 : vector<16x128xf32>, i32 -> vector<16x128xf32>
    %291 = arith.addf %289, %290 : vector<16x128xf32>
    %cst_182 = arith.constant 0.109360687 : f32
    %292 = vector.broadcast %cst_182 : f32 to vector<16x128xf32>
    %293 = arith.mulf %292, %291 : vector<16x128xf32>
    %294 = arith.addf %288, %293 : vector<16x128xf32>
    %c3_i32_183 = arith.constant 3 : i32
    %295 = tpu.dynamic_rotate %268 by %c3_i32_183 dim 1 : vector<16x128xf32>, i32 -> vector<16x128xf32>
    %c125_i32_184 = arith.constant 125 : i32
    %296 = tpu.dynamic_rotate %268 by %c125_i32_184 dim 1 : vector<16x128xf32>, i32 -> vector<16x128xf32>
    %297 = arith.addf %295, %296 : vector<16x128xf32>
    %cst_185 = arith.constant 0.213005543 : f32
    %298 = vector.broadcast %cst_185 : f32 to vector<16x128xf32>
    %299 = arith.mulf %298, %297 : vector<16x128xf32>
    %300 = arith.addf %294, %299 : vector<16x128xf32>
    %301 = arith.subf %300, %161 : vector<16x128xf32>
    %302 = arith.addf %235, %301 : vector<16x128xf32>
    %cst_186 = arith.constant 8.99999984E-4 : f32
    %303 = vector.broadcast %cst_186 : f32 to vector<16x128xf32>
    %304 = arith.addf %302, %303 : vector<16x128xf32>
    %305 = arith.mulf %165, %304 : vector<16x128xf32>
    %c8_187 = arith.constant 8 : index
    %c0_188 = arith.constant 0 : index
    %306 = vector.load %arg13[%c8_187, %c0_188] : memref<32x128xf32, #tpu.memory_space<vmem>>, vector<16x128xf32>
    %cst_189 = arith.constant 0.266011715 : f32
    %307 = vector.broadcast %cst_189 : f32 to vector<16x128xf32>
    %308 = arith.mulf %307, %306 : vector<16x128xf32>
    %c3_190 = arith.constant 3 : index
    %c0_191 = arith.constant 0 : index
    %309 = vector.load %arg13[%c3_190, %c0_191] : memref<32x128xf32, #tpu.memory_space<vmem>>, vector<16x128xf32>
    %c13_192 = arith.constant 13 : index
    %c0_193 = arith.constant 0 : index
    %310 = vector.load %arg13[%c13_192, %c0_193] : memref<32x128xf32, #tpu.memory_space<vmem>>, vector<16x128xf32>
    %311 = arith.addf %309, %310 : vector<16x128xf32>
    %cst_194 = arith.constant 0.00102838012 : f32
    %312 = vector.broadcast %cst_194 : f32 to vector<16x128xf32>
    %313 = arith.mulf %312, %311 : vector<16x128xf32>
    %314 = arith.addf %308, %313 : vector<16x128xf32>
    %c4_195 = arith.constant 4 : index
    %c0_196 = arith.constant 0 : index
    %315 = vector.load %arg13[%c4_195, %c0_196] : memref<32x128xf32, #tpu.memory_space<vmem>>, vector<16x128xf32>
    %c12_197 = arith.constant 12 : index
    %c0_198 = arith.constant 0 : index
    %316 = vector.load %arg13[%c12_197, %c0_198] : memref<32x128xf32, #tpu.memory_space<vmem>>, vector<16x128xf32>
    %317 = arith.addf %315, %316 : vector<16x128xf32>
    %cst_199 = arith.constant 0.00759875821 : f32
    %318 = vector.broadcast %cst_199 : f32 to vector<16x128xf32>
    %319 = arith.mulf %318, %317 : vector<16x128xf32>
    %320 = arith.addf %314, %319 : vector<16x128xf32>
    %c5_200 = arith.constant 5 : index
    %c0_201 = arith.constant 0 : index
    %321 = vector.load %arg13[%c5_200, %c0_201] : memref<32x128xf32, #tpu.memory_space<vmem>>, vector<16x128xf32>
    %c11_202 = arith.constant 11 : index
    %c0_203 = arith.constant 0 : index
    %322 = vector.load %arg13[%c11_202, %c0_203] : memref<32x128xf32, #tpu.memory_space<vmem>>, vector<16x128xf32>
    %323 = arith.addf %321, %322 : vector<16x128xf32>
    %cst_204 = arith.constant 0.0360007733 : f32
    %324 = vector.broadcast %cst_204 : f32 to vector<16x128xf32>
    %325 = arith.mulf %324, %323 : vector<16x128xf32>
    %326 = arith.addf %320, %325 : vector<16x128xf32>
    %c6_205 = arith.constant 6 : index
    %c0_206 = arith.constant 0 : index
    %327 = vector.load %arg13[%c6_205, %c0_206] : memref<32x128xf32, #tpu.memory_space<vmem>>, vector<16x128xf32>
    %c10_207 = arith.constant 10 : index
    %c0_208 = arith.constant 0 : index
    %328 = vector.load %arg13[%c10_207, %c0_208] : memref<32x128xf32, #tpu.memory_space<vmem>>, vector<16x128xf32>
    %329 = arith.addf %327, %328 : vector<16x128xf32>
    %cst_209 = arith.constant 0.109360687 : f32
    %330 = vector.broadcast %cst_209 : f32 to vector<16x128xf32>
    %331 = arith.mulf %330, %329 : vector<16x128xf32>
    %332 = arith.addf %326, %331 : vector<16x128xf32>
    %c7_210 = arith.constant 7 : index
    %c0_211 = arith.constant 0 : index
    %333 = vector.load %arg13[%c7_210, %c0_211] : memref<32x128xf32, #tpu.memory_space<vmem>>, vector<16x128xf32>
    %c9_212 = arith.constant 9 : index
    %c0_213 = arith.constant 0 : index
    %334 = vector.load %arg13[%c9_212, %c0_213] : memref<32x128xf32, #tpu.memory_space<vmem>>, vector<16x128xf32>
    %335 = arith.addf %333, %334 : vector<16x128xf32>
    %cst_214 = arith.constant 0.213005543 : f32
    %336 = vector.broadcast %cst_214 : f32 to vector<16x128xf32>
    %337 = arith.mulf %336, %335 : vector<16x128xf32>
    %338 = arith.addf %332, %337 : vector<16x128xf32>
    %cst_215 = arith.constant 0.266011715 : f32
    %339 = vector.broadcast %cst_215 : f32 to vector<16x128xf32>
    %340 = arith.mulf %339, %338 : vector<16x128xf32>
    %c15_i32_216 = arith.constant 15 : i32
    %341 = tpu.dynamic_rotate %338 by %c15_i32_216 dim 1 : vector<16x128xf32>, i32 -> vector<16x128xf32>
    %c113_i32_217 = arith.constant 113 : i32
    %342 = tpu.dynamic_rotate %338 by %c113_i32_217 dim 1 : vector<16x128xf32>, i32 -> vector<16x128xf32>
    %343 = arith.addf %341, %342 : vector<16x128xf32>
    %cst_218 = arith.constant 0.00102838012 : f32
    %344 = vector.broadcast %cst_218 : f32 to vector<16x128xf32>
    %345 = arith.mulf %344, %343 : vector<16x128xf32>
    %346 = arith.addf %340, %345 : vector<16x128xf32>
    %c12_i32_219 = arith.constant 12 : i32
    %347 = tpu.dynamic_rotate %338 by %c12_i32_219 dim 1 : vector<16x128xf32>, i32 -> vector<16x128xf32>
    %c116_i32_220 = arith.constant 116 : i32
    %348 = tpu.dynamic_rotate %338 by %c116_i32_220 dim 1 : vector<16x128xf32>, i32 -> vector<16x128xf32>
    %349 = arith.addf %347, %348 : vector<16x128xf32>
    %cst_221 = arith.constant 0.00759875821 : f32
    %350 = vector.broadcast %cst_221 : f32 to vector<16x128xf32>
    %351 = arith.mulf %350, %349 : vector<16x128xf32>
    %352 = arith.addf %346, %351 : vector<16x128xf32>
    %c9_i32_222 = arith.constant 9 : i32
    %353 = tpu.dynamic_rotate %338 by %c9_i32_222 dim 1 : vector<16x128xf32>, i32 -> vector<16x128xf32>
    %c119_i32_223 = arith.constant 119 : i32
    %354 = tpu.dynamic_rotate %338 by %c119_i32_223 dim 1 : vector<16x128xf32>, i32 -> vector<16x128xf32>
    %355 = arith.addf %353, %354 : vector<16x128xf32>
    %cst_224 = arith.constant 0.0360007733 : f32
    %356 = vector.broadcast %cst_224 : f32 to vector<16x128xf32>
    %357 = arith.mulf %356, %355 : vector<16x128xf32>
    %358 = arith.addf %352, %357 : vector<16x128xf32>
    %c6_i32_225 = arith.constant 6 : i32
    %359 = tpu.dynamic_rotate %338 by %c6_i32_225 dim 1 : vector<16x128xf32>, i32 -> vector<16x128xf32>
    %c122_i32_226 = arith.constant 122 : i32
    %360 = tpu.dynamic_rotate %338 by %c122_i32_226 dim 1 : vector<16x128xf32>, i32 -> vector<16x128xf32>
    %361 = arith.addf %359, %360 : vector<16x128xf32>
    %cst_227 = arith.constant 0.109360687 : f32
    %362 = vector.broadcast %cst_227 : f32 to vector<16x128xf32>
    %363 = arith.mulf %362, %361 : vector<16x128xf32>
    %364 = arith.addf %358, %363 : vector<16x128xf32>
    %c3_i32_228 = arith.constant 3 : i32
    %365 = tpu.dynamic_rotate %338 by %c3_i32_228 dim 1 : vector<16x128xf32>, i32 -> vector<16x128xf32>
    %c125_i32_229 = arith.constant 125 : i32
    %366 = tpu.dynamic_rotate %338 by %c125_i32_229 dim 1 : vector<16x128xf32>, i32 -> vector<16x128xf32>
    %367 = arith.addf %365, %366 : vector<16x128xf32>
    %cst_230 = arith.constant 0.213005543 : f32
    %368 = vector.broadcast %cst_230 : f32 to vector<16x128xf32>
    %369 = arith.mulf %368, %367 : vector<16x128xf32>
    %370 = arith.addf %364, %369 : vector<16x128xf32>
    %371 = arith.subf %370, %162 : vector<16x128xf32>
    %cst_231 = arith.constant 2.000000e+00 : f32
    %372 = vector.broadcast %cst_231 : f32 to vector<16x128xf32>
    %373 = arith.mulf %372, %371 : vector<16x128xf32>
    %cst_232 = arith.constant 8.99999984E-4 : f32
    %374 = vector.broadcast %cst_232 : f32 to vector<16x128xf32>
    %375 = arith.addf %373, %374 : vector<16x128xf32>
    %376 = arith.mulf %169, %375 : vector<16x128xf32>
    %377 = tpu.reciprocal %305 {approx = true} : vector<16x128xf32> -> vector<16x128xf32>
    %378 = arith.mulf %305, %377 : vector<16x128xf32>
    %cst_233 = arith.constant 2.000000e+00 : f32
    %379 = vector.broadcast %cst_233 : f32 to vector<16x128xf32>
    %380 = arith.subf %379, %378 : vector<16x128xf32>
    %381 = arith.mulf %377, %380 : vector<16x128xf32>
    %382 = tpu.iota {dimensions = array<i32: 1>} : vector<16x128xi32>
    %c48_i32 = arith.constant 48 : i32
    %383 = vector.broadcast %c48_i32 : i32 to vector<16x128xi32>
    %384 = arith.cmpi slt, %382, %383 : vector<16x128xi32>
    %385 = arith.mulf %376, %381 : vector<16x128xf32>
    %cst_234 = arith.constant 0.000000e+00 : f32
    %386 = vector.broadcast %cst_234 : f32 to vector<16x128xf32>
    %387 = arith.select %384, %385, %386 : vector<16x128xi1>, vector<16x128xf32>
    %cst_235 = arith.constant dense<0.000000e+00> : vector<128xf32>
    %388 = vector.multi_reduction <add>, %387, %cst_235 [0] : vector<16x128xf32> to vector<128xf32>
    %389 = vector.shape_cast %388 : vector<128xf32> to vector<1x128xf32>
    %c0_236 = arith.constant 0 : index
    %c0_237 = arith.constant 0 : index
    %c0_238 = arith.constant 0 : index
    %c0_239 = arith.constant 0 : index
    %390 = vector.load %arg8[%c0_236, %c0_237, %c0_238, %c0_239] : memref<1x1x8x128xf32, #tpu.memory_space<vmem>>, vector<1x1x1x128xf32>
    %391 = vector.shape_cast %390 : vector<1x1x1x128xf32> to vector<1x128xf32>
    %392 = vector.shape_cast %389 : vector<1x128xf32> to vector<1x1x1x128xf32>
    tpu.vector_store %arg8[%c0_236, %c0_237, %c0_238, %c0_239], %392 {strides = array<i32>} : memref<1x1x8x128xf32, #tpu.memory_space<vmem>>, vector<1x1x1x128xf32>,
    %c0_240 = arith.constant 0 : index
    %c0_241 = arith.constant 0 : index
    %c1 = arith.constant 1 : index
    %c0_242 = arith.constant 0 : index
    %393 = vector.load %arg8[%c0_240, %c0_241, %c1, %c0_242] : memref<1x1x8x128xf32, #tpu.memory_space<vmem>>, vector<1x1x1x128xf32>
    %394 = vector.shape_cast %393 : vector<1x1x1x128xf32> to vector<1x128xf32>
    %395 = vector.shape_cast %29 : vector<1x128xf32> to vector<1x1x1x128xf32>
    tpu.vector_store %arg8[%c0_240, %c0_241, %c1, %c0_242], %395 {strides = array<i32>} : memref<1x1x8x128xf32, #tpu.memory_space<vmem>>, vector<1x1x1x128xf32>,
    return
  }
  func.func @transform_0(%arg0: i32, %arg1: i32) -> (i32, i32, i32) {
    %c0_i32 = arith.constant 0 : i32
    %c0_i32_0 = arith.constant 0 : i32
    return %arg0, %arg1, %c0_i32 : i32, i32, i32
  }
  func.func @transform_1(%arg0: i32, %arg1: i32) -> (i32, i32, i32) {
    %c2_i32 = arith.constant 2 : i32
    %0 = arith.muli %arg1, %c2_i32 : i32
    %c1_i32 = arith.constant 1 : i32
    %1 = arith.subi %0, %c1_i32 : i32
    %c0_i32 = arith.constant 0 : i32
    %2 = arith.maxsi %1, %c0_i32 : i32
    %c0_i32_0 = arith.constant 0 : i32
    %c0_i32_1 = arith.constant 0 : i32
    return %arg0, %2, %c0_i32_0 : i32, i32, i32
  }
  func.func @transform_2(%arg0: i32, %arg1: i32) -> (i32, i32, i32) {
    %c1_i32 = arith.constant 1 : i32
    %0 = arith.addi %arg1, %c1_i32 : i32
    %c2_i32 = arith.constant 2 : i32
    %1 = arith.muli %0, %c2_i32 : i32
    %c1_i32_0 = arith.constant 1 : i32
    %2 = arith.minsi %1, %c1_i32_0 : i32
    %c0_i32 = arith.constant 0 : i32
    %c0_i32_1 = arith.constant 0 : i32
    return %arg0, %2, %c0_i32 : i32, i32, i32
  }
  func.func @transform_3(%arg0: i32, %arg1: i32) -> (i32, i32, i32) {
    %c0_i32 = arith.constant 0 : i32
    %c0_i32_0 = arith.constant 0 : i32
    return %arg0, %arg1, %c0_i32 : i32, i32, i32
  }
  func.func @transform_4(%arg0: i32, %arg1: i32) -> (i32, i32, i32) {
    %c2_i32 = arith.constant 2 : i32
    %0 = arith.muli %arg1, %c2_i32 : i32
    %c1_i32 = arith.constant 1 : i32
    %1 = arith.subi %0, %c1_i32 : i32
    %c0_i32 = arith.constant 0 : i32
    %2 = arith.maxsi %1, %c0_i32 : i32
    %c0_i32_0 = arith.constant 0 : i32
    %c0_i32_1 = arith.constant 0 : i32
    return %arg0, %2, %c0_i32_0 : i32, i32, i32
  }
  func.func @transform_5(%arg0: i32, %arg1: i32) -> (i32, i32, i32) {
    %c1_i32 = arith.constant 1 : i32
    %0 = arith.addi %arg1, %c1_i32 : i32
    %c2_i32 = arith.constant 2 : i32
    %1 = arith.muli %0, %c2_i32 : i32
    %c1_i32_0 = arith.constant 1 : i32
    %2 = arith.minsi %1, %c1_i32_0 : i32
    %c0_i32 = arith.constant 0 : i32
    %c0_i32_1 = arith.constant 0 : i32
    return %arg0, %2, %c0_i32 : i32, i32, i32
  }
  func.func @transform_6(%arg0: i32, %arg1: i32) -> (i32, i32, i32, i32) {
    %c0_i32 = arith.constant 0 : i32
    %c0_i32_0 = arith.constant 0 : i32
    %c0_i32_1 = arith.constant 0 : i32
    return %arg0, %arg1, %c0_i32, %c0_i32_0 : i32, i32, i32, i32
  }
}

</mosaic_0001>

<llo_original>
// kernel: tpu_custom_call.1
$region0: #{tpu_custom_call.1}
  #allocation0 [shape = 'u32[]', space=smem, size = 0x4, offset = 0x4, fixed_abs, tag = 'smem constant byte address 0x4 - core index']
  #allocation1 [shape = 'u32[144,128]{1,0:T(1,128)}', space=vmem, size = 0x12000, scoped, tag = 'internal scratch']
  #allocation2 [shape = 'f32[32,128]{1,0:T(8,128)}', space=vmem, size = 0x4000, scoped, tag = 'scratch operand']
  #allocation3 [shape = 'f32[32,128]{1,0:T(8,128)}', space=vmem, size = 0x4000, scoped, tag = 'scratch operand']
  #allocation4 [shape = 'f32[32,128]{1,0:T(8,128)}', space=vmem, size = 0x4000, scoped, tag = 'scratch operand']
  #allocation5 [shape = 'f32[32,128]{1,0:T(8,128)}', space=vmem, size = 0x4000, scoped, tag = 'scratch operand']
  #allocation6 [shape = 'f32[32,128]{1,0:T(8,128)}', space=vmem, size = 0x4000, scoped, tag = 'scratch operand']
  %s0 = inlined_call_operand.hbm [shape: f32[2,16,48], index: 0, kind: input, shape index: {}]
  %s1 = inlined_call_operand.hbm [shape: f32[2,16,48], index: 1, kind: input, shape index: {}]
  %s2 = inlined_call_operand.hbm [shape: f32[2,16,48], index: 2, kind: input, shape index: {}]
  %s3 = inlined_call_operand.hbm [shape: f32[2,16,48], index: 3, kind: input, shape index: {}]
  %s4 = inlined_call_operand.hbm [shape: f32[2,16,48], index: 4, kind: input, shape index: {}]
  %s5 = inlined_call_operand.hbm [shape: f32[2,16,48], index: 5, kind: input, shape index: {}]
  %s6 = inlined_call_operand.hbm [shape: f32[2,1,8,128], index: 6, kind: output, shape index: {}]
  %s7 = sld [smem:[#allocation0]]
  $region89: #{tpu_custom_call.1} parent=0
    _
  %s9 = ssub.s32 1, %s7
  %s10 = scalar_select 0, %s9, %s7
  $region1: #{tpu_custom_call.1} parent=0
    #allocation7 [shape = 'u8[16384]{0}', space=vmem, size = 0x4000, scoped, tag = 'input window, operand 0']
    #allocation8 [shape = 's32[2]{0}', space=sflag, size = 0x8, scoped, tag = 'scoped memory for tpu_custom_call.1']
    #allocation9 [shape = 's32[2]{0}', space=sflag, size = 0x8, scoped, tag = 'scoped memory for tpu_custom_call.1']
    #allocation10 [shape = 'u8[8192]{0}', space=vmem, size = 0x2000, scoped, tag = 'input window, operand 1']
    #allocation11 [shape = 's32[2]{0}', space=sflag, size = 0x8, scoped, tag = 'scoped memory for tpu_custom_call.1']
    #allocation12 [shape = 'u8[8192]{0}', space=vmem, size = 0x2000, scoped, tag = 'input window, operand 2']
    #allocation13 [shape = 'u8[16384]{0}', space=vmem, size = 0x4000, scoped, tag = 'input window, operand 3']
    #allocation14 [shape = 's32[2]{0}', space=sflag, size = 0x8, scoped, tag = 'scoped memory for tpu_custom_call.1']
    #allocation15 [shape = 'u8[8192]{0}', space=vmem, size = 0x2000, scoped, tag = 'input window, operand 4']
    #allocation16 [shape = 'u8[8192]{0}', space=vmem, size = 0x2000, scoped, tag = 'input window, operand 5']
    #allocation17 [shape = 's32[2]{0}', space=sflag, size = 0x8, scoped, tag = 'scoped memory for tpu_custom_call.1']
    #allocation18 [shape = 'u8[8192]{0}', space=vmem, size = 0x2000, scoped, tag = 'output window, operand 0']
    %11 = vsyncpa [#allocation8], 0
    %s12 = scalar_lea.sflag [#allocation8], 1
    %13 = vsyncpa %s12, 0
    %14 = vsyncpa [#allocation11], 0
    %s15 = scalar_lea.sflag [#allocation11], 1
    %16 = vsyncpa %s15, 0
    %17 = vsyncpa [#allocation14], 0
    %s18 = scalar_lea.sflag [#allocation14], 1
    %19 = vsyncpa %s18, 0
    %20 = vsyncpa [#allocation17], 0
    %s21 = scalar_lea.sflag [#allocation17], 1
    %22 = vsyncpa %s21, 0
    %23 = vsyncpa [#allocation9], 0
    %s24 = scalar_lea.sflag [#allocation9], 1
    %25 = vsyncpa %s24, 0
    loop: start=0, step=1, limit=4
    $region2: #{tpu_custom_call.1} parent=1 // loop_pre_header
      _
    $region3: #{tpu_custom_call.1} parent=1 // loop_header
      %s27 = sphi 0, %s31
      %p28 = scmp.ge.s32.totalorder %s27, 4
      %s34 = sphi 0, %s46
      %s35 = sphi 0, %s42
      %s36 = sphi 0, %s34
      %s37 = sphi 0, %s35
      %s38 = sphi 0, %s36
      %s39 = sphi 0, %s37
      %s51 = sphi 0, %s53
      %s54 = sphi 0, %s51
      %s55 = sphi 0, %s54
      %s71 = sphi 0, %s55
      %s87 = sphi 0, %s89
      %s90 = sphi 0, %s87
      %s91 = sphi 0, %s90
      %s107 = sphi 0, %s91
      %s123 = sphi 0, %s125
      %s126 = sphi 0, %s123
      %s127 = sphi 0, %s126
      %s143 = sphi 0, %s127
      %s151 = sphi 0, %s153
      %s154 = sphi 0, %s151
      %s155 = sphi 0, %s154
      %s171 = sphi 0, %s155
      %s187 = sphi 0, %s189
      %s190 = sphi 0, %s187
      %s191 = sphi 0, %s190
      %s207 = sphi 0, %s191
      %s223 = sphi 0, %s225
      %s226 = sphi 0, %s223
      %s227 = sphi 0, %s226
      %s243 = sphi 0, %s227
      %s251 = sphi 0, %s253
      %s254 = sphi 0, %s251
      %s255 = sphi 0, %s254
      %s271 = sphi 0, %s255
    $region4: #{tpu_custom_call.1} parent=1 // loop_header_branch
      %30 = sbr.rel (%p28) target = $region8
    $region5: #{tpu_custom_call.1} parent=1 // loop_body
      %s32 = ssub.s32 %s27, 1
      %s33 = ssub.s32 %s27, 2
      %s40 = sadd.s32 1, %s35
      %p41 = scmp.ge.s32.totalorder %s40, 1
      %s42 = scalar_select %p41, 0, %s40
      %s43 = sadd.s32 1, %s34
      %s44 = scalar_select %p41, %s43, %s34
      %p45 = scmp.ge.s32.totalorder %s44, 2
      %s46 = scalar_select %p45, 0, %s44
      %s47 = ssub.s32 %s34, %s46
      %s48 = ssub.s32 %s35, %s42
      %s49 = sor.u32 %s47, %s48
      %p50 = scmp.eq.s32.totalorder %s49, 0
      %s52 = sadd.s32 %s51, 1
      %s53 = scalar_select %p50, %s51, %s52
      %p56 = pneg %p50
      %p57 = scmp.eq.s32.totalorder %s27, 1
      %p58 = por %p56, %p57
      %p59 = scmp.ne.s32.totalorder %s51, %s54
      %p60 = scmp.eq.s32.totalorder %s27, 0
      %p61 = por %p59, %p60
      %p62 = scmp.ne.s32.totalorder %s51, %s54
      %p63 = scmp.eq.s32.totalorder %s32, 1
      %p64 = por %p62, %p63
      %p65 = scmp.ne.s32.totalorder %s54, %s55
      %p66 = scmp.eq.s32.totalorder %s32, 0
      %p67 = por %p65, %p66
      %p68 = scmp.ne.s32.totalorder %s54, %s55
      %p69 = scmp.eq.s32.totalorder %s33, 1
      %p70 = por %p68, %p69
      %p72 = scmp.ne.s32.totalorder %s55, %s71
      %p73 = scmp.eq.s32.totalorder %s33, 0
      %p74 = por %p72, %p73
      %s75 = smul.u32 %s35, 2
      %s76 = ssub.s32 %s75, 1
      %p77 = scmp.gt.s32.totalorder %s76, 0
      %s78 = scalar_select %p77, %s76, 0
      %s79 = smul.u32 %s42, 2
      %s80 = ssub.s32 %s79, 1
      %p81 = scmp.gt.s32.totalorder %s80, 0
      %s82 = scalar_select %p81, %s80, 0
      %s83 = ssub.s32 %s34, %s46
      %s84 = ssub.s32 %s78, %s82
      %s85 = sor.u32 %s83, %s84
      %p86 = scmp.eq.s32.totalorder %s85, 0
      %s88 = sadd.s32 %s87, 1
      %s89 = scalar_select %p86, %s87, %s88
      %p92 = pneg %p86
      %p93 = scmp.eq.s32.totalorder %s27, 1
      %p94 = por %p92, %p93
      %p95 = scmp.ne.s32.totalorder %s87, %s90
      %p96 = scmp.eq.s32.totalorder %s27, 0
      %p97 = por %p95, %p96
      %p98 = scmp.ne.s32.totalorder %s87, %s90
      %p99 = scmp.eq.s32.totalorder %s32, 1
      %p100 = por %p98, %p99
      %p101 = scmp.ne.s32.totalorder %s90, %s91
      %p102 = scmp.eq.s32.totalorder %s32, 0
      %p103 = por %p101, %p102
      %p104 = scmp.ne.s32.totalorder %s90, %s91
      %p105 = scmp.eq.s32.totalorder %s33, 1
      %p106 = por %p104, %p105
      %p108 = scmp.ne.s32.totalorder %s91, %s107
      %p109 = scmp.eq.s32.totalorder %s33, 0
      %p110 = por %p108, %p109
      %s111 = sadd.s32 %s35, 1
      %s112 = smul.u32 %s111, 2
      %p113 = scmp.lt.s32.totalorder %s112, 1
      %s114 = scalar_select %p113, %s112, 1
      %s115 = sadd.s32 %s42, 1
      %s116 = smul.u32 %s115, 2
      %p117 = scmp.lt.s32.totalorder %s116, 1
      %s118 = scalar_select %p117, %s116, 1
      %s119 = ssub.s32 %s34, %s46
      %s120 = ssub.s32 %s114, %s118
      %s121 = sor.u32 %s119, %s120
      %p122 = scmp.eq.s32.totalorder %s121, 0
      %s124 = sadd.s32 %s123, 1
      %s125 = scalar_select %p122, %s123, %s124
      %p128 = pneg %p122
      %p129 = scmp.eq.s32.totalorder %s27, 1
      %p130 = por %p128, %p129
      %p131 = scmp.ne.s32.totalorder %s123, %s126
      %p132 = scmp.eq.s32.totalorder %s27, 0
      %p133 = por %p131, %p132
      %p134 = scmp.ne.s32.totalorder %s123, %s126
      %p135 = scmp.eq.s32.totalorder %s32, 1
      %p136 = por %p134, %p135
      %p137 = scmp.ne.s32.totalorder %s126, %s127
      %p138 = scmp.eq.s32.totalorder %s32, 0
      %p139 = por %p137, %p138
      %p140 = scmp.ne.s32.totalorder %s126, %s127
      %p141 = scmp.eq.s32.totalorder %s33, 1
      %p142 = por %p140, %p141
      %p144 = scmp.ne.s32.totalorder %s127, %s143
      %p145 = scmp.eq.s32.totalorder %s33, 0
      %p146 = por %p144, %p145
      %s147 = ssub.s32 %s34, %s46
      %s148 = ssub.s32 %s35, %s42
      %s149 = sor.u32 %s147, %s148
      %p150 = scmp.eq.s32.totalorder %s149, 0
      %s152 = sadd.s32 %s151, 1
      %s153 = scalar_select %p150, %s151, %s152
      %p156 = pneg %p150
      %p157 = scmp.eq.s32.totalorder %s27, 1
      %p158 = por %p156, %p157
      %p159 = scmp.ne.s32.totalorder %s151, %s154
      %p160 = scmp.eq.s32.totalorder %s27, 0
      %p161 = por %p159, %p160
      %p162 = scmp.ne.s32.totalorder %s151, %s154
      %p163 = scmp.eq.s32.totalorder %s32, 1
      %p164 = por %p162, %p163
      %p165 = scmp.ne.s32.totalorder %s154, %s155
      %p166 = scmp.eq.s32.totalorder %s32, 0
      %p167 = por %p165, %p166
      %p168 = scmp.ne.s32.totalorder %s154, %s155
      %p169 = scmp.eq.s32.totalorder %s33, 1
      %p170 = por %p168, %p169
      %p172 = scmp.ne.s32.totalorder %s155, %s171
      %p173 = scmp.eq.s32.totalorder %s33, 0
      %p174 = por %p172, %p173
      %s175 = smul.u32 %s35, 2
      %s176 = ssub.s32 %s175, 1
      %p177 = scmp.gt.s32.totalorder %s176, 0
      %s178 = scalar_select %p177, %s176, 0
      %s179 = smul.u32 %s42, 2
      %s180 = ssub.s32 %s179, 1
      %p181 = scmp.gt.s32.totalorder %s180, 0
      %s182 = scalar_select %p181, %s180, 0
      %s183 = ssub.s32 %s34, %s46
      %s184 = ssub.s32 %s178, %s182
      %s185 = sor.u32 %s183, %s184
      %p186 = scmp.eq.s32.totalorder %s185, 0
      %s188 = sadd.s32 %s187, 1
      %s189 = scalar_select %p186, %s187, %s188
      %p192 = pneg %p186
      %p193 = scmp.eq.s32.totalorder %s27, 1
      %p194 = por %p192, %p193
      %p195 = scmp.ne.s32.totalorder %s187, %s190
      %p196 = scmp.eq.s32.totalorder %s27, 0
      %p197 = por %p195, %p196
      %p198 = scmp.ne.s32.totalorder %s187, %s190
      %p199 = scmp.eq.s32.totalorder %s32, 1
      %p200 = por %p198, %p199
      %p201 = scmp.ne.s32.totalorder %s190, %s191
      %p202 = scmp.eq.s32.totalorder %s32, 0
      %p203 = por %p201, %p202
      %p204 = scmp.ne.s32.totalorder %s190, %s191
      %p205 = scmp.eq.s32.totalorder %s33, 1
      %p206 = por %p204, %p205
      %p208 = scmp.ne.s32.totalorder %s191, %s207
      %p209 = scmp.eq.s32.totalorder %s33, 0
      %p210 = por %p208, %p209
      %s211 = sadd.s32 %s35, 1
      %s212 = smul.u32 %s211, 2
      %p213 = scmp.lt.s32.totalorder %s212, 1
      %s214 = scalar_select %p213, %s212, 1
      %s215 = sadd.s32 %s42, 1
      %s216 = smul.u32 %s215, 2
      %p217 = scmp.lt.s32.totalorder %s216, 1
      %s218 = scalar_select %p217, %s216, 1
      %s219 = ssub.s32 %s34, %s46
      %s220 = ssub.s32 %s214, %s218
      %s221 = sor.u32 %s219, %s220
      %p222 = scmp.eq.s32.totalorder %s221, 0
      %s224 = sadd.s32 %s223, 1
      %s225 = scalar_select %p222, %s223, %s224
      %p228 = pneg %p222
      %p229 = scmp.eq.s32.totalorder %s27, 1
      %p230 = por %p228, %p229
      %p231 = scmp.ne.s32.totalorder %s223, %s226
      %p232 = scmp.eq.s32.totalorder %s27, 0
      %p233 = por %p231, %p232
      %p234 = scmp.ne.s32.totalorder %s223, %s226
      %p235 = scmp.eq.s32.totalorder %s32, 1
      %p236 = por %p234, %p235
      %p237 = scmp.ne.s32.totalorder %s226, %s227
      %p238 = scmp.eq.s32.totalorder %s32, 0
      %p239 = por %p237, %p238
      %p240 = scmp.ne.s32.totalorder %s226, %s227
      %p241 = scmp.eq.s32.totalorder %s33, 1
      %p242 = por %p240, %p241
      %p244 = scmp.ne.s32.totalorder %s227, %s243
      %p245 = scmp.eq.s32.totalorder %s33, 0
      %p246 = por %p244, %p245
      %s247 = ssub.s32 %s34, %s46
      %s248 = ssub.s32 %s35, %s42
      %s249 = sor.u32 %s247, %s248
      %p250 = scmp.eq.s32.totalorder %s249, 0
      %s252 = sadd.s32 %s251, 1
      %s253 = scalar_select %p250, %s251, %s252
      %p256 = pneg %p250
      %p257 = scmp.eq.s32.totalorder %s27, 1
      %p258 = por %p256, %p257
      %p259 = scmp.ne.s32.totalorder %s251, %s254
      %p260 = scmp.eq.s32.totalorder %s27, 0
      %p261 = por %p259, %p260
      %p262 = scmp.ne.s32.totalorder %s251, %s254
      %p263 = scmp.eq.s32.totalorder %s32, 1
      %p264 = por %p262, %p263
      %p265 = scmp.ne.s32.totalorder %s254, %s255
      %p266 = scmp.eq.s32.totalorder %s32, 0
      %p267 = por %p265, %p266
      %p268 = scmp.ne.s32.totalorder %s254, %s255
      %p269 = scmp.eq.s32.totalorder %s33, 1
      %p270 = por %p268, %p269
      %p272 = scmp.ne.s32.totalorder %s255, %s271
      %p273 = scmp.eq.s32.totalorder %s33, 0
      %p274 = por %p272, %p273
      %p275 = scmp.le.s32.totalorder 1, %s27
      %p276 = scmp.lt.s32.totalorder %s27, 3
      %p277 = pnand %p275, %p276
      %p278 = pneg %p277
      // Predicated region
      $region9: #{tpu_custom_call.1} parent=5 // pred_check
        _
      $region10: #{tpu_custom_call.1} parent=5 // pred_check_branch
        %280 = sbr.rel (%p277) target = $region12
      $region11: #{tpu_custom_call.1} parent=5 // pred_region
        %s281 = ssub.s32 %s27, 1
      $region12: #{tpu_custom_call.1} parent=5 // pred_fallthru
        _
      %p282 = scmp.lt.s32.totalorder %s27, 2
      // Predicated region
      $region13: #{tpu_custom_call.1} parent=5 // pred_check
        %p283 = pneg %p282
      $region14: #{tpu_custom_call.1} parent=5 // pred_check_branch
        %285 = sbr.rel (%p283) target = $region16
      $region15: #{tpu_custom_call.1} parent=5 // pred_region
        // Predicated region
        $region17: #{tpu_custom_call.1} parent=15 // pred_check
          %p286 = pneg %p61
        $region18: #{tpu_custom_call.1} parent=15 // pred_check_branch
          %288 = sbr.rel (%p286) target = $region20
        $region19: #{tpu_custom_call.1} parent=15 // pred_region
          %s289 = sand.u32 %s51, 1
          %s290 = scalar_lea.sflag [#allocation8], %s289
          %s291 = sand.u32 %s51, 1
          %s292 = smul.addr %s291, 16
          %s293 = scalar_lea.vmem [#allocation7], %s292
          %s294 = smul.u32 2, %s35
          %s296 = ssub.s32 256, 256
          %297 = vsyncadd %s290, %s296
          %s298 = smul.addr %s34, 2
          %s299 = sadd.s32 %s294, %s298
          %s300 = smul.addr %s299, 128
          %s301 = scalar_lea.hbm %s0, %s300
          %s302 = sshll.u32 %s293, 4
          %s303 = int_to_ptr.vmem [resolvable:$true] %s302
          %308 = dma.hbm_to_vmem [thread:$0]  %s301, 256, %s303, %s290, 128, 128, 8
        $region20: #{tpu_custom_call.1} parent=15 // pred_fallthru
          _
        // Predicated region
        $region21: #{tpu_custom_call.1} parent=15 // pred_check
          %p309 = pneg %p97
        $region22: #{tpu_custom_call.1} parent=15 // pred_check_branch
          %311 = sbr.rel (%p309) target = $region24
        $region23: #{tpu_custom_call.1} parent=15 // pred_region
          %s312 = sand.u32 %s27, 1
          %s313 = scalar_lea.sflag [#allocation11], %s312
          %s314 = sand.u32 %s87, 1
          %s315 = smul.addr %s314, 8
          %s316 = scalar_lea.vmem [#allocation10], %s315
          %s317 = smul.u32 %s35, 2
          %s318 = ssub.s32 %s317, 1
          %p319 = scmp.gt.s32.totalorder %s318, 0
          %s320 = scalar_select %p319, %s318, 0
          %s322 = ssub.s32 128, 128
          %323 = vsyncadd %s313, %s322
          %s324 = smul.addr %s34, 2
          %s325 = sadd.s32 %s320, %s324
          %s326 = smul.addr %s325, 128
          %s327 = scalar_lea.hbm %s1, %s326
          %s329 = sshll.u32 %s316, 4
          %s330 = int_to_ptr.vmem [resolvable:$true] %s329
          %332 = dma.hbm_to_vmem [thread:$0]  %s327, 128, %s330, %s313
        $region24: #{tpu_custom_call.1} parent=15 // pred_fallthru
          _
        // Predicated region
        $region25: #{tpu_custom_call.1} parent=15 // pred_check
          %p333 = pneg %p133
        $region26: #{tpu_custom_call.1} parent=15 // pred_check_branch
          %335 = sbr.rel (%p333) target = $region28
        $region27: #{tpu_custom_call.1} parent=15 // pred_region
          %s336 = sand.u32 %s27, 1
          %s337 = scalar_lea.sflag [#allocation11], %s336
          %s338 = sand.u32 %s123, 1
          %s339 = smul.addr %s338, 8
          %s340 = scalar_lea.vmem [#allocation12], %s339
          %s341 = sadd.s32 %s35, 1
          %s342 = smul.u32 %s341, 2
          %p343 = scmp.lt.s32.totalorder %s342, 1
          %s344 = scalar_select %p343, %s342, 1
          %s346 = ssub.s32 128, 128
          %347 = vsyncadd %s337, %s346
          %s348 = smul.addr %s34, 2
          %s349 = sadd.s32 %s344, %s348
          %s350 = smul.addr %s349, 128
          %s351 = scalar_lea.hbm %s2, %s350
          %s353 = sshll.u32 %s340, 4
          %s354 = int_to_ptr.vmem [resolvable:$true] %s353
          %356 = dma.hbm_to_vmem [thread:$0]  %s351, 128, %s354, %s337
        $region28: #{tpu_custom_call.1} parent=15 // pred_fallthru
          _
        // Predicated region
        $region29: #{tpu_custom_call.1} parent=15 // pred_check
          %p357 = pneg %p161
        $region30: #{tpu_custom_call.1} parent=15 // pred_check_branch
          %359 = sbr.rel (%p357) target = $region32
        $region31: #{tpu_custom_call.1} parent=15 // pred_region
          %s360 = sand.u32 %s27, 1
          %s361 = scalar_lea.sflag [#allocation14], %s360
          %s362 = sand.u32 %s151, 1
          %s363 = smul.addr %s362, 16
          %s364 = scalar_lea.vmem [#allocation13], %s363
          %s365 = smul.u32 2, %s35
          %s367 = ssub.s32 256, 256
          %368 = vsyncadd %s361, %s367
          %s369 = smul.addr %s34, 2
          %s370 = sadd.s32 %s365, %s369
          %s371 = smul.addr %s370, 128
          %s372 = scalar_lea.hbm %s3, %s371
          %s373 = sshll.u32 %s364, 4
          %s374 = int_to_ptr.vmem [resolvable:$true] %s373
          %379 = dma.hbm_to_vmem [thread:$0]  %s372, 256, %s374, %s361, 128, 128, 8
        $region32: #{tpu_custom_call.1} parent=15 // pred_fallthru
          _
        // Predicated region
        $region33: #{tpu_custom_call.1} parent=15 // pred_check
          %p380 = pneg %p197
        $region34: #{tpu_custom_call.1} parent=15 // pred_check_branch
          %382 = sbr.rel (%p380) target = $region36
        $region35: #{tpu_custom_call.1} parent=15 // pred_region
          %s383 = sand.u32 %s27, 1
          %s384 = scalar_lea.sflag [#allocation14], %s383
          %s385 = sand.u32 %s187, 1
          %s386 = smul.addr %s385, 8
          %s387 = scalar_lea.vmem [#allocation15], %s386
          %s388 = smul.u32 %s35, 2
          %s389 = ssub.s32 %s388, 1
          %p390 = scmp.gt.s32.totalorder %s389, 0
          %s391 = scalar_select %p390, %s389, 0
          %s393 = ssub.s32 128, 128
          %394 = vsyncadd %s384, %s393
          %s395 = smul.addr %s34, 2
          %s396 = sadd.s32 %s391, %s395
          %s397 = smul.addr %s396, 128
          %s398 = scalar_lea.hbm %s4, %s397
          %s400 = sshll.u32 %s387, 4
          %s401 = int_to_ptr.vmem [resolvable:$true] %s400
          %403 = dma.hbm_to_vmem [thread:$0]  %s398, 128, %s401, %s384
        $region36: #{tpu_custom_call.1} parent=15 // pred_fallthru
          _
        // Predicated region
        $region37: #{tpu_custom_call.1} parent=15 // pred_check
          %p404 = pneg %p233
        $region38: #{tpu_custom_call.1} parent=15 // pred_check_branch
          %406 = sbr.rel (%p404) target = $region40
        $region39: #{tpu_custom_call.1} parent=15 // pred_region
          %s407 = sand.u32 %s223, 1
          %s408 = scalar_lea.sflag [#allocation17], %s407
          %s409 = sand.u32 %s223, 1
          %s410 = smul.addr %s409, 8
          %s411 = scalar_lea.vmem [#allocation16], %s410
          %s412 = sadd.s32 %s35, 1
          %s413 = smul.u32 %s412, 2
          %p414 = scmp.lt.s32.totalorder %s413, 1
          %s415 = scalar_select %p414, %s413, 1
          %s417 = ssub.s32 128, 128
          %418 = vsyncadd %s408, %s417
          %s419 = smul.addr %s34, 2
          %s420 = sadd.s32 %s415, %s419
          %s421 = smul.addr %s420, 128
          %s422 = scalar_lea.hbm %s5, %s421
          %s424 = sshll.u32 %s411, 4
          %s425 = int_to_ptr.vmem [resolvable:$true] %s424
          %427 = dma.hbm_to_vmem [thread:$0]  %s422, 128, %s425, %s408
        $region40: #{tpu_custom_call.1} parent=15 // pred_fallthru
          _
      $region16: #{tpu_custom_call.1} parent=5 // pred_fallthru
        _
      %p428 = scmp.le.s32.totalorder 1, %s27
      %p429 = scmp.lt.s32.totalorder %s27, 3
      %p430 = pnand %p428, %p429
      %p431 = pneg %p430
      // Predicated region
      $region41: #{tpu_custom_call.1} parent=5 // pred_check
        _
      $region42: #{tpu_custom_call.1} parent=5 // pred_check_branch
        %433 = sbr.rel (%p430) target = $region44
      $region43: #{tpu_custom_call.1} parent=5 // pred_region
        %s434 = ssub.s32 %s27, 1
        %s435 = sand.u32 %s54, 1
        %s436 = scalar_lea.sflag [#allocation8], %s435
        %s437 = sand.u32 %s54, 1
        %s438 = smul.addr %s437, 16
        %s439 = scalar_lea.vmem [#allocation7], %s438
        // Predicated region
        $region45: #{tpu_custom_call.1} parent=43 // pred_check
          %p440 = pneg %p67
        $region46: #{tpu_custom_call.1} parent=43 // pred_check_branch
          %442 = sbr.rel (%p440) target = $region48
        $region47: #{tpu_custom_call.1} parent=43 // pred_region
          %443 = dma.done %s436, 256
        $region48: #{tpu_custom_call.1} parent=43 // pred_fallthru
          _
        %s444 = sand.u32 %s32, 1
        %s445 = scalar_lea.sflag [#allocation11], %s444
        %s446 = sand.u32 %s90, 1
        %s447 = smul.addr %s446, 8
        %s448 = scalar_lea.vmem [#allocation10], %s447
        // Predicated region
        $region49: #{tpu_custom_call.1} parent=43 // pred_check
          %p449 = pneg %p103
        $region50: #{tpu_custom_call.1} parent=43 // pred_check_branch
          %451 = sbr.rel (%p449) target = $region52
        $region51: #{tpu_custom_call.1} parent=43 // pred_region
          %452 = dma.done %s445, 128
        $region52: #{tpu_custom_call.1} parent=43 // pred_fallthru
          _
        %s453 = sand.u32 %s32, 1
        %s454 = scalar_lea.sflag [#allocation11], %s453
        %s455 = sand.u32 %s126, 1
        %s456 = smul.addr %s455, 8
        %s457 = scalar_lea.vmem [#allocation12], %s456
        // Predicated region
        $region53: #{tpu_custom_call.1} parent=43 // pred_check
          %p458 = pneg %p139
        $region54: #{tpu_custom_call.1} parent=43 // pred_check_branch
          %460 = sbr.rel (%p458) target = $region56
        $region55: #{tpu_custom_call.1} parent=43 // pred_region
          %461 = dma.done %s454, 128
        $region56: #{tpu_custom_call.1} parent=43 // pred_fallthru
          _
        %s462 = sand.u32 %s32, 1
        %s463 = scalar_lea.sflag [#allocation14], %s462
        %s464 = sand.u32 %s154, 1
        %s465 = smul.addr %s464, 16
        %s466 = scalar_lea.vmem [#allocation13], %s465
        // Predicated region
        $region57: #{tpu_custom_call.1} parent=43 // pred_check
          %p467 = pneg %p167
        $region58: #{tpu_custom_call.1} parent=43 // pred_check_branch
          %469 = sbr.rel (%p467) target = $region60
        $region59: #{tpu_custom_call.1} parent=43 // pred_region
          %470 = dma.done %s463, 256
        $region60: #{tpu_custom_call.1} parent=43 // pred_fallthru
          _
        %s471 = sand.u32 %s32, 1
        %s472 = scalar_lea.sflag [#allocation14], %s471
        %s473 = sand.u32 %s190, 1
        %s474 = smul.addr %s473, 8
        %s475 = scalar_lea.vmem [#allocation15], %s474
        // Predicated region
        $region61: #{tpu_custom_call.1} parent=43 // pred_check
          %p476 = pneg %p203
        $region62: #{tpu_custom_call.1} parent=43 // pred_check_branch
          %478 = sbr.rel (%p476) target = $region64
        $region63: #{tpu_custom_call.1} parent=43 // pred_region
          %479 = dma.done %s472, 128
        $region64: #{tpu_custom_call.1} parent=43 // pred_fallthru
          _
        %s480 = sand.u32 %s226, 1
        %s481 = scalar_lea.sflag [#allocation17], %s480
        %s482 = sand.u32 %s226, 1
        %s483 = smul.addr %s482, 8
        %s484 = scalar_lea.vmem [#allocation16], %s483
        // Predicated region
        $region65: #{tpu_custom_call.1} parent=43 // pred_check
          %p485 = pneg %p239
        $region66: #{tpu_custom_call.1} parent=43 // pred_check_branch
          %487 = sbr.rel (%p485) target = $region68
        $region67: #{tpu_custom_call.1} parent=43 // pred_region
          %488 = dma.done %s481, 128
        $region68: #{tpu_custom_call.1} parent=43 // pred_fallthru
          _
        %s489 = sand.u32 %s54, 1
        %s490 = scalar_lea.sflag [#allocation8], %s489
        %s491 = sand.u32 %s54, 1
        %s492 = smul.addr %s491, 16
        %s493 = scalar_lea.vmem [#allocation7], %s492
        %p494 = pneg %p67
        %p495 = pneg %p64
        %s496 = sand.u32 %s32, 1
        %s497 = scalar_lea.sflag [#allocation11], %s496
        %s498 = sand.u32 %s90, 1
        %s499 = smul.addr %s498, 8
        %s500 = scalar_lea.vmem [#allocation10], %s499
        %p501 = pneg %p103
        %p502 = pneg %p100
        %s503 = sand.u32 %s32, 1
        %s504 = scalar_lea.sflag [#allocation11], %s503
        %s505 = sand.u32 %s126, 1
        %s506 = smul.addr %s505, 8
        %s507 = scalar_lea.vmem [#allocation12], %s506
        %p508 = pneg %p139
        %p509 = pneg %p136
        %s510 = sand.u32 %s32, 1
        %s511 = scalar_lea.sflag [#allocation14], %s510
        %s512 = sand.u32 %s154, 1
        %s513 = smul.addr %s512, 16
        %s514 = scalar_lea.vmem [#allocation13], %s513
        %p515 = pneg %p167
        %p516 = pneg %p164
        %s517 = sand.u32 %s32, 1
        %s518 = scalar_lea.sflag [#allocation14], %s517
        %s519 = sand.u32 %s190, 1
        %s520 = smul.addr %s519, 8
        %s521 = scalar_lea.vmem [#allocation15], %s520
        %p522 = pneg %p203
        %p523 = pneg %p200
        %s524 = sand.u32 %s226, 1
        %s525 = scalar_lea.sflag [#allocation17], %s524
        %s526 = sand.u32 %s226, 1
        %s527 = smul.addr %s526, 8
        %s528 = scalar_lea.vmem [#allocation16], %s527
        %p529 = pneg %p239
        %p530 = pneg %p236
        %p531 = pneg %p267
        %p532 = pneg %p264
        %s533 = sand.u32 %s254, 1
        %s534 = scalar_lea.sflag [#allocation9], %s533
        %s535 = sand.u32 %s254, 1
        %s536 = smul.addr %s535, 8
        %s537 = scalar_lea.vmem [#allocation18], %s536
        %s538 = smul.u32 2, %s37
        %s539 = smul.u32 %s37, 2
        %s540 = ssub.s32 %s539, 1
        %p541 = scmp.gt.s32.totalorder %s540, 0
        %s542 = scalar_select %p541, %s540, 0
        %s543 = sadd.s32 %s37, 1
        %s544 = smul.u32 %s543, 2
        %p545 = scmp.lt.s32.totalorder %s544, 1
        %s546 = scalar_select %p545, %s544, 1
        %s547 = smul.u32 2, %s37
        %s548 = smul.u32 %s37, 2
        %s549 = ssub.s32 %s548, 1
        %p550 = scmp.gt.s32.totalorder %s549, 0
        %s551 = scalar_select %p550, %s549, 0
        %s552 = sadd.s32 %s37, 1
        %s553 = smul.u32 %s552, 2
        %p554 = scmp.lt.s32.totalorder %s553, 1
        %s555 = scalar_select %p554, %s553, 1
        %556 = vst [vmem:[#allocation2] sm:$0xff] 0.0
        %557 = vst [vmem:[#allocation2 + $0x8] sm:$0xff] 0.0
        %558 = vst [vmem:[#allocation2 + $0x10] sm:$0xff] 0.0
        %559 = vst [vmem:[#allocation2 + $0x18] sm:$0xff] 0.0
        %560 = vst [vmem:[#allocation3] sm:$0xff] 0.0
        %561 = vst [vmem:[#allocation3 + $0x8] sm:$0xff] 0.0
        %562 = vst [vmem:[#allocation3 + $0x10] sm:$0xff] 0.0
        %563 = vst [vmem:[#allocation3 + $0x18] sm:$0xff] 0.0
        %v564 = vld [vmem:[%s439] sm:$0xff]
        %v565 = vld [vmem:[%s439 + $0x8] sm:$0xff]
        %vm566 = vcmask 392192
        %567 = vst.msk [vmem:[#allocation2 + $0x8] sm:$0xff] %vm566, %v564
        %568 = vst.msk [vmem:[#allocation2 + $0x10] sm:$0xff] %vm566, %v565
        %v569 = vld [vmem:[%s466] sm:$0xff]
        %v570 = vld [vmem:[%s466 + $0x8] sm:$0xff]
        %571 = vst.msk [vmem:[#allocation3 + $0x8] sm:$0xff] %vm566, %v569
        %572 = vst.msk [vmem:[#allocation3 + $0x10] sm:$0xff] %vm566, %v570
        %p573 = scmp.gt.s32.totalorder %s37, 0
        // Predicated region
        $region69: #{tpu_custom_call.1} parent=43 // pred_check
          %p574 = pneg %p573
        $region70: #{tpu_custom_call.1} parent=43 // pred_check_branch
          %576 = sbr.rel (%p574) target = $region72
        $region71: #{tpu_custom_call.1} parent=43 // pred_region
          %v577 = vld [vmem:[%s448] sm:$0xff]
          %578 = vst.msk [vmem:[#allocation2] sm:$0xff] %vm566, %v577
          %v579 = vld [vmem:[%s475] sm:$0xff]
          %580 = vst.msk [vmem:[#allocation3] sm:$0xff] %vm566, %v579
        $region72: #{tpu_custom_call.1} parent=43 // pred_fallthru
          _
        %p581 = scmp.lt.s32.totalorder %s37, 0
        // Predicated region
        $region73: #{tpu_custom_call.1} parent=43 // pred_check
          %p582 = pneg %p581
        $region74: #{tpu_custom_call.1} parent=43 // pred_check_branch
          %584 = sbr.rel (%p582) target = $region76
        $region75: #{tpu_custom_call.1} parent=43 // pred_region
          %v585 = vld [vmem:[%s457] sm:$0xff]
          %586 = vst.msk [vmem:[#allocation2 + $0x18] sm:$0xff] %vm566, %v585
          %v587 = vld [vmem:[%s484] sm:$0xff]
          %588 = vst.msk [vmem:[#allocation3 + $0x18] sm:$0xff] %vm566, %v587
        $region76: #{tpu_custom_call.1} parent=43 // pred_fallthru
          _
        %v589 = vld [vmem:[#allocation2] sm:$0xff]
        %v590 = vld [vmem:[#allocation2 + $0x8] sm:$0xff]
        %v591 = vld [vmem:[#allocation2 + $0x10] sm:$0xff]
        %v592 = vld [vmem:[#allocation2 + $0x18] sm:$0xff]
        %v593 = vld [vmem:[#allocation3] sm:$0xff]
        %v594 = vld [vmem:[#allocation3 + $0x8] sm:$0xff]
        %v595 = vld [vmem:[#allocation3 + $0x10] sm:$0xff]
        %v596 = vld [vmem:[#allocation3 + $0x18] sm:$0xff]
        %v597 = vmul.f32 %v589, %v589
        %v598 = vmul.f32 %v590, %v590
        %v599 = vmul.f32 %v591, %v591
        %v600 = vmul.f32 %v592, %v592
        %601 = vst [vmem:[#allocation4] sm:$0xff] %v597
        %602 = vst [vmem:[#allocation4 + $0x8] sm:$0xff] %v598
        %603 = vst [vmem:[#allocation4 + $0x10] sm:$0xff] %v599
        %604 = vst [vmem:[#allocation4 + $0x18] sm:$0xff] %v600
        %v605 = vmul.f32 %v593, %v593
        %v606 = vmul.f32 %v594, %v594
        %v607 = vmul.f32 %v595, %v595
        %v608 = vmul.f32 %v596, %v596
        %609 = vst [vmem:[#allocation5] sm:$0xff] %v605
        %610 = vst [vmem:[#allocation5 + $0x8] sm:$0xff] %v606
        %611 = vst [vmem:[#allocation5 + $0x10] sm:$0xff] %v607
        %612 = vst [vmem:[#allocation5 + $0x18] sm:$0xff] %v608
        %v613 = vmul.f32 %v589, %v593
        %v614 = vmul.f32 %v590, %v594
        %v615 = vmul.f32 %v591, %v595
        %v616 = vmul.f32 %v592, %v596
        %617 = vst [vmem:[#allocation6] sm:$0xff] %v613
        %618 = vst [vmem:[#allocation6 + $0x8] sm:$0xff] %v614
        %619 = vst [vmem:[#allocation6 + $0x10] sm:$0xff] %v615
        %620 = vst [vmem:[#allocation6 + $0x18] sm:$0xff] %v616
        %v621 = vsub.f32 %v590, %v594
        %v622 = vsub.f32 %v591, %v595
        %v623 = vand.u32 2147483647, %v621
        %v624 = vand.u32 2147483647, %v622
        %v625 = vadd.f32 %v623, %v624
        %v626 = vrot.slane %v625, 4
        %v627 = vadd.f32 %v625, %v626
        %v628 = vrot.slane %v627, 2
        %v629 = vadd.f32 %v627, %v628
        %v630 = vrot.slane %v629, 1
        %v631 = vadd.f32 %v629, %v630
        %v632 = vld [vmem:[#allocation2 + $0x8] sm:$0xff]
        %v633 = vld [vmem:[#allocation2 + $0x10] sm:$0xff]
        %v634 = vmul.f32 %v632, 0.26601171
        %v635 = vmul.f32 %v633, 0.26601171
        %v636 = vld [vmem:[#allocation2 + $0x3] sm:$0xff]
        %v637 = vld [vmem:[#allocation2 + $0xb] sm:$0xff]
        %v638 = vld [vmem:[#allocation2 + $0xd] sm:$0xff]
        %v639 = vld [vmem:[#allocation2 + $0x15] sm:$0xff]
        %v640 = vadd.f32 %v636, %v638
        %v641 = vadd.f32 %v637, %v639
        %v642 = vmul.f32 %v640, 0.0010283801
        %v643 = vmul.f32 %v641, 0.0010283801
        %v644 = vadd.f32 %v634, %v642
        %v645 = vadd.f32 %v635, %v643
        %v646 = vld [vmem:[#allocation2 + $0x4] sm:$0xff]
        %v647 = vld [vmem:[#allocation2 + $0xc] sm:$0xff]
        %v648 = vld [vmem:[#allocation2 + $0x14] sm:$0xff]
        %v649 = vadd.f32 %v646, %v647
        %v650 = vadd.f32 %v647, %v648
        %v651 = vmul.f32 %v649, 0.007598758
        %v652 = vmul.f32 %v650, 0.007598758
        %v653 = vadd.f32 %v644, %v651
        %v654 = vadd.f32 %v645, %v652
        %v655 = vld [vmem:[#allocation2 + $0x5] sm:$0xff]
        %v656 = vld [vmem:[#allocation2 + $0x13] sm:$0xff]
        %v657 = vadd.f32 %v655, %v637
        %v658 = vadd.f32 %v638, %v656
        %v659 = vmul.f32 %v657, 0.036000773
        %v660 = vmul.f32 %v658, 0.036000773
        %v661 = vadd.f32 %v653, %v659
        %v662 = vadd.f32 %v654, %v660
        %v663 = vld [vmem:[#allocation2 + $0x6] sm:$0xff]
        %v664 = vld [vmem:[#allocation2 + $0xe] sm:$0xff]
        %v665 = vld [vmem:[#allocation2 + $0xa] sm:$0xff]
        %v666 = vld [vmem:[#allocation2 + $0x12] sm:$0xff]
        %v667 = vadd.f32 %v663, %v665
        %v668 = vadd.f32 %v664, %v666
        %v669 = vmul.f32 %v667, 0.10936069
        %v670 = vmul.f32 %v668, 0.10936069
        %v671 = vadd.f32 %v661, %v669
        %v672 = vadd.f32 %v662, %v670
        %v673 = vld [vmem:[#allocation2 + $0x7] sm:$0xff]
        %v674 = vld [vmem:[#allocation2 + $0xf] sm:$0xff]
        %v675 = vld [vmem:[#allocation2 + $0x9] sm:$0xff]
        %v676 = vld [vmem:[#allocation2 + $0x11] sm:$0xff]
        %v677 = vadd.f32 %v673, %v675
        %v678 = vadd.f32 %v674, %v676
        %v679 = vmul.f32 %v677, 0.21300554
        %v680 = vmul.f32 %v678, 0.21300554
        %v681 = vadd.f32 %v671, %v679
        %v682 = vadd.f32 %v672, %v680
        %v683 = vmul.f32 %v681, 0.26601171
        %v684 = vmul.f32 %v682, 0.26601171
        %685 = vrot.lane.b32.xlu0 %v681, 15
        %v686 = vpop.permute.xlu0 %685
        %687 = vrot.lane.b32.xlu0 %v682, 15
        %v688 = vpop.permute.xlu0 %687
        %689 = vrot.lane.b32.xlu0 %v681, 113
        %v690 = vpop.permute.xlu0 %689
        %691 = vrot.lane.b32.xlu0 %v682, 113
        %v692 = vpop.permute.xlu0 %691
        %v693 = vadd.f32 %v686, %v690
        %v694 = vadd.f32 %v688, %v692
        %v695 = vmul.f32 %v693, 0.0010283801
        %v696 = vmul.f32 %v694, 0.0010283801
        %v697 = vadd.f32 %v683, %v695
        %v698 = vadd.f32 %v684, %v696
        %699 = vrot.lane.b32.xlu0 %v681, 12
        %v700 = vpop.permute.xlu0 %699
        %701 = vrot.lane.b32.xlu0 %v682, 12
        %v702 = vpop.permute.xlu0 %701
        %703 = vrot.lane.b32.xlu0 %v681, 116
        %v704 = vpop.permute.xlu0 %703
        %705 = vrot.lane.b32.xlu0 %v682, 116
        %v706 = vpop.permute.xlu0 %705
        %v707 = vadd.f32 %v700, %v704
        %v708 = vadd.f32 %v702, %v706
        %v709 = vmul.f32 %v707, 0.007598758
        %v710 = vmul.f32 %v708, 0.007598758
        %v711 = vadd.f32 %v697, %v709
        %v712 = vadd.f32 %v698, %v710
        %713 = vrot.lane.b32.xlu0 %v681, 9
        %v714 = vpop.permute.xlu0 %713
        %715 = vrot.lane.b32.xlu0 %v682, 9
        %v716 = vpop.permute.xlu0 %715
        %717 = vrot.lane.b32.xlu0 %v681, 119
        %v718 = vpop.permute.xlu0 %717
        %719 = vrot.lane.b32.xlu0 %v682, 119
        %v720 = vpop.permute.xlu0 %719
        %v721 = vadd.f32 %v714, %v718
        %v722 = vadd.f32 %v716, %v720
        %v723 = vmul.f32 %v721, 0.036000773
        %v724 = vmul.f32 %v722, 0.036000773
        %v725 = vadd.f32 %v711, %v723
        %v726 = vadd.f32 %v712, %v724
        %727 = vrot.lane.b32.xlu0 %v681, 6
        %v728 = vpop.permute.xlu0 %727
        %729 = vrot.lane.b32.xlu0 %v682, 6
        %v730 = vpop.permute.xlu0 %729
        %731 = vrot.lane.b32.xlu0 %v681, 122
        %v732 = vpop.permute.xlu0 %731
        %733 = vrot.lane.b32.xlu0 %v682, 122
        %v734 = vpop.permute.xlu0 %733
        %v735 = vadd.f32 %v728, %v732
        %v736 = vadd.f32 %v730, %v734
        %v737 = vmul.f32 %v735, 0.10936069
        %v738 = vmul.f32 %v736, 0.10936069
        %v739 = vadd.f32 %v725, %v737
        %v740 = vadd.f32 %v726, %v738
        %741 = vrot.lane.b32.xlu0 %v681, 3
        %v742 = vpop.permute.xlu0 %741
        %743 = vrot.lane.b32.xlu0 %v682, 3
        %v744 = vpop.permute.xlu0 %743
        %745 = vrot.lane.b32.xlu0 %v681, 125
        %v746 = vpop.permute.xlu0 %745
        %747 = vrot.lane.b32.xlu0 %v682, 125
        %v748 = vpop.permute.xlu0 %747
        %v749 = vadd.f32 %v742, %v746
        %v750 = vadd.f32 %v744, %v748
        %v751 = vmul.f32 %v749, 0.21300554
        %v752 = vmul.f32 %v750, 0.21300554
        %v753 = vadd.f32 %v739, %v751
        %v754 = vadd.f32 %v740, %v752
        %v755 = vmul.f32 %v753, %v753
        %v756 = vmul.f32 %v754, %v754
        %v757 = vld [vmem:[#allocation3 + $0x8] sm:$0xff]
        %v758 = vld [vmem:[#allocation3 + $0x10] sm:$0xff]
        %v759 = vmul.f32 %v757, 0.26601171
        %v760 = vmul.f32 %v758, 0.26601171
        %v761 = vld [vmem:[#allocation3 + $0x3] sm:$0xff]
        %v762 = vld [vmem:[#allocation3 + $0xb] sm:$0xff]
        %v763 = vld [vmem:[#allocation3 + $0xd] sm:$0xff]
        %v764 = vld [vmem:[#allocation3 + $0x15] sm:$0xff]
        %v765 = vadd.f32 %v761, %v763
        %v766 = vadd.f32 %v762, %v764
        %v767 = vmul.f32 %v765, 0.0010283801
        %v768 = vmul.f32 %v766, 0.0010283801
        %v769 = vadd.f32 %v759, %v767
        %v770 = vadd.f32 %v760, %v768
        %v771 = vld [vmem:[#allocation3 + $0x4] sm:$0xff]
        %v772 = vld [vmem:[#allocation3 + $0xc] sm:$0xff]
        %v773 = vld [vmem:[#allocation3 + $0x14] sm:$0xff]
        %v774 = vadd.f32 %v771, %v772
        %v775 = vadd.f32 %v772, %v773
        %v776 = vmul.f32 %v774, 0.007598758
        %v777 = vmul.f32 %v775, 0.007598758
        %v778 = vadd.f32 %v769, %v776
        %v779 = vadd.f32 %v770, %v777
        %v780 = vld [vmem:[#allocation3 + $0x5] sm:$0xff]
        %v781 = vld [vmem:[#allocation3 + $0x13] sm:$0xff]
        %v782 = vadd.f32 %v780, %v762
        %v783 = vadd.f32 %v763, %v781
        %v784 = vmul.f32 %v782, 0.036000773
        %v785 = vmul.f32 %v783, 0.036000773
        %v786 = vadd.f32 %v778, %v784
        %v787 = vadd.f32 %v779, %v785
        %v788 = vld [vmem:[#allocation3 + $0x6] sm:$0xff]
        %v789 = vld [vmem:[#allocation3 + $0xe] sm:$0xff]
        %v790 = vld [vmem:[#allocation3 + $0xa] sm:$0xff]
        %v791 = vld [vmem:[#allocation3 + $0x12] sm:$0xff]
        %v792 = vadd.f32 %v788, %v790
        %v793 = vadd.f32 %v789, %v791
        %v794 = vmul.f32 %v792, 0.10936069
        %v795 = vmul.f32 %v793, 0.10936069
        %v796 = vadd.f32 %v786, %v794
        %v797 = vadd.f32 %v787, %v795
        %v798 = vld [vmem:[#allocation3 + $0x7] sm:$0xff]
        %v799 = vld [vmem:[#allocation3 + $0xf] sm:$0xff]
        %v800 = vld [vmem:[#allocation3 + $0x9] sm:$0xff]
        %v801 = vld [vmem:[#allocation3 + $0x11] sm:$0xff]
        %v802 = vadd.f32 %v798, %v800
        %v803 = vadd.f32 %v799, %v801
        %v804 = vmul.f32 %v802, 0.21300554
        %v805 = vmul.f32 %v803, 0.21300554
        %v806 = vadd.f32 %v796, %v804
        %v807 = vadd.f32 %v797, %v805
        %v808 = vmul.f32 %v806, 0.26601171
        %v809 = vmul.f32 %v807, 0.26601171
        %810 = vrot.lane.b32.xlu0 %v806, 15
        %v811 = vpop.permute.xlu0 %810
        %812 = vrot.lane.b32.xlu0 %v807, 15
        %v813 = vpop.permute.xlu0 %812
        %814 = vrot.lane.b32.xlu0 %v806, 113
        %v815 = vpop.permute.xlu0 %814
        %816 = vrot.lane.b32.xlu0 %v807, 113
        %v817 = vpop.permute.xlu0 %816
        %v818 = vadd.f32 %v811, %v815
        %v819 = vadd.f32 %v813, %v817
        %v820 = vmul.f32 %v818, 0.0010283801
        %v821 = vmul.f32 %v819, 0.0010283801
        %v822 = vadd.f32 %v808, %v820
        %v823 = vadd.f32 %v809, %v821
        %824 = vrot.lane.b32.xlu0 %v806, 12
        %v825 = vpop.permute.xlu0 %824
        %826 = vrot.lane.b32.xlu0 %v807, 12
        %v827 = vpop.permute.xlu0 %826
        %828 = vrot.lane.b32.xlu0 %v806, 116
        %v829 = vpop.permute.xlu0 %828
        %830 = vrot.lane.b32.xlu0 %v807, 116
        %v831 = vpop.permute.xlu0 %830
        %v832 = vadd.f32 %v825, %v829
        %v833 = vadd.f32 %v827, %v831
        %v834 = vmul.f32 %v832, 0.007598758
        %v835 = vmul.f32 %v833, 0.007598758
        %v836 = vadd.f32 %v822, %v834
        %v837 = vadd.f32 %v823, %v835
        %838 = vrot.lane.b32.xlu0 %v806, 9
        %v839 = vpop.permute.xlu0 %838
        %840 = vrot.lane.b32.xlu0 %v807, 9
        %v841 = vpop.permute.xlu0 %840
        %842 = vrot.lane.b32.xlu0 %v806, 119
        %v843 = vpop.permute.xlu0 %842
        %844 = vrot.lane.b32.xlu0 %v807, 119
        %v845 = vpop.permute.xlu0 %844
        %v846 = vadd.f32 %v839, %v843
        %v847 = vadd.f32 %v841, %v845
        %v848 = vmul.f32 %v846, 0.036000773
        %v849 = vmul.f32 %v847, 0.036000773
        %v850 = vadd.f32 %v836, %v848
        %v851 = vadd.f32 %v837, %v849
        %852 = vrot.lane.b32.xlu0 %v806, 6
        %v853 = vpop.permute.xlu0 %852
        %854 = vrot.lane.b32.xlu0 %v807, 6
        %v855 = vpop.permute.xlu0 %854
        %856 = vrot.lane.b32.xlu0 %v806, 122
        %v857 = vpop.permute.xlu0 %856
        %858 = vrot.lane.b32.xlu0 %v807, 122
        %v859 = vpop.permute.xlu0 %858
        %v860 = vadd.f32 %v853, %v857
        %v861 = vadd.f32 %v855, %v859
        %v862 = vmul.f32 %v860, 0.10936069
        %v863 = vmul.f32 %v861, 0.10936069
        %v864 = vadd.f32 %v850, %v862
        %v865 = vadd.f32 %v851, %v863
        %866 = vrot.lane.b32.xlu0 %v806, 3
        %v867 = vpop.permute.xlu0 %866
        %868 = vrot.lane.b32.xlu0 %v807, 3
        %v869 = vpop.permute.xlu0 %868
        %870 = vrot.lane.b32.xlu0 %v806, 125
        %v871 = vpop.permute.xlu0 %870
        %872 = vrot.lane.b32.xlu0 %v807, 125
        %v873 = vpop.permute.xlu0 %872
        %v874 = vadd.f32 %v867, %v871
        %v875 = vadd.f32 %v869, %v873
        %v876 = vmul.f32 %v874, 0.21300554
        %v877 = vmul.f32 %v875, 0.21300554
        %v878 = vadd.f32 %v864, %v876
        %v879 = vadd.f32 %v865, %v877
        %v880 = vmul.f32 %v878, %v878
        %v881 = vmul.f32 %v879, %v879
        %v882 = vmul.f32 %v753, %v878
        %v883 = vmul.f32 %v754, %v879
        %v884 = vadd.f32 %v755, %v880
        %v885 = vadd.f32 %v756, %v881
        %v886 = vadd.f32 %v884, 0.0001
        %v887 = vadd.f32 %v885, 0.0001
        %v888 = vmul.f32 %v882, 2.0
        %v889 = vmul.f32 %v883, 2.0
        %v890 = vadd.f32 %v888, 0.0001
        %v891 = vadd.f32 %v889, 0.0001
        %v892 = vld [vmem:[#allocation4 + $0x8] sm:$0xff]
        %v893 = vld [vmem:[#allocation4 + $0x10] sm:$0xff]
        %v894 = vmul.f32 %v892, 0.26601171
        %v895 = vmul.f32 %v893, 0.26601171
        %v896 = vld [vmem:[#allocation4 + $0x3] sm:$0xff]
        %v897 = vld [vmem:[#allocation4 + $0xb] sm:$0xff]
        %v898 = vld [vmem:[#allocation4 + $0xd] sm:$0xff]
        %v899 = vld [vmem:[#allocation4 + $0x15] sm:$0xff]
        %v900 = vadd.f32 %v896, %v898
        %v901 = vadd.f32 %v897, %v899
        %v902 = vmul.f32 %v900, 0.0010283801
        %v903 = vmul.f32 %v901, 0.0010283801
        %v904 = vadd.f32 %v894, %v902
        %v905 = vadd.f32 %v895, %v903
        %v906 = vld [vmem:[#allocation4 + $0x4] sm:$0xff]
        %v907 = vld [vmem:[#allocation4 + $0xc] sm:$0xff]
        %v908 = vld [vmem:[#allocation4 + $0x14] sm:$0xff]
        %v909 = vadd.f32 %v906, %v907
        %v910 = vadd.f32 %v907, %v908
        %v911 = vmul.f32 %v909, 0.007598758
        %v912 = vmul.f32 %v910, 0.007598758
        %v913 = vadd.f32 %v904, %v911
        %v914 = vadd.f32 %v905, %v912
        %v915 = vld [vmem:[#allocation4 + $0x5] sm:$0xff]
        %v916 = vld [vmem:[#allocation4 + $0x13] sm:$0xff]
        %v917 = vadd.f32 %v915, %v897
        %v918 = vadd.f32 %v898, %v916
        %v919 = vmul.f32 %v917, 0.036000773
        %v920 = vmul.f32 %v918, 0.036000773
        %v921 = vadd.f32 %v913, %v919
        %v922 = vadd.f32 %v914, %v920
        %v923 = vld [vmem:[#allocation4 + $0x6] sm:$0xff]
        %v924 = vld [vmem:[#allocation4 + $0xe] sm:$0xff]
        %v925 = vld [vmem:[#allocation4 + $0xa] sm:$0xff]
        %v926 = vld [vmem:[#allocation4 + $0x12] sm:$0xff]
        %v927 = vadd.f32 %v923, %v925
        %v928 = vadd.f32 %v924, %v926
        %v929 = vmul.f32 %v927, 0.10936069
        %v930 = vmul.f32 %v928, 0.10936069
        %v931 = vadd.f32 %v921, %v929
        %v932 = vadd.f32 %v922, %v930
        %v933 = vld [vmem:[#allocation4 + $0x7] sm:$0xff]
        %v934 = vld [vmem:[#allocation4 + $0xf] sm:$0xff]
        %v935 = vld [vmem:[#allocation4 + $0x9] sm:$0xff]
        %v936 = vld [vmem:[#allocation4 + $0x11] sm:$0xff]
        %v937 = vadd.f32 %v933, %v935
        %v938 = vadd.f32 %v934, %v936
        %v939 = vmul.f32 %v937, 0.21300554
        %v940 = vmul.f32 %v938, 0.21300554
        %v941 = vadd.f32 %v931, %v939
        %v942 = vadd.f32 %v932, %v940
        %v943 = vmul.f32 %v941, 0.26601171
        %v944 = vmul.f32 %v942, 0.26601171
        %945 = vrot.lane.b32.xlu0 %v941, 15
        %v946 = vpop.permute.xlu0 %945
        %947 = vrot.lane.b32.xlu0 %v942, 15
        %v948 = vpop.permute.xlu0 %947
        %949 = vrot.lane.b32.xlu0 %v941, 113
        %v950 = vpop.permute.xlu0 %949
        %951 = vrot.lane.b32.xlu0 %v942, 113
        %v952 = vpop.permute.xlu0 %951
        %v953 = vadd.f32 %v946, %v950
        %v954 = vadd.f32 %v948, %v952
        %v955 = vmul.f32 %v953, 0.0010283801
        %v956 = vmul.f32 %v954, 0.0010283801
        %v957 = vadd.f32 %v943, %v955
        %v958 = vadd.f32 %v944, %v956
        %959 = vrot.lane.b32.xlu0 %v941, 12
        %v960 = vpop.permute.xlu0 %959
        %961 = vrot.lane.b32.xlu0 %v942, 12
        %v962 = vpop.permute.xlu0 %961
        %963 = vrot.lane.b32.xlu0 %v941, 116
        %v964 = vpop.permute.xlu0 %963
        %965 = vrot.lane.b32.xlu0 %v942, 116
        %v966 = vpop.permute.xlu0 %965
        %v967 = vadd.f32 %v960, %v964
        %v968 = vadd.f32 %v962, %v966
        %v969 = vmul.f32 %v967, 0.007598758
        %v970 = vmul.f32 %v968, 0.007598758
        %v971 = vadd.f32 %v957, %v969
        %v972 = vadd.f32 %v958, %v970
        %973 = vrot.lane.b32.xlu0 %v941, 9
        %v974 = vpop.permute.xlu0 %973
        %975 = vrot.lane.b32.xlu0 %v942, 9
        %v976 = vpop.permute.xlu0 %975
        %977 = vrot.lane.b32.xlu0 %v941, 119
        %v978 = vpop.permute.xlu0 %977
        %979 = vrot.lane.b32.xlu0 %v942, 119
        %v980 = vpop.permute.xlu0 %979
        %v981 = vadd.f32 %v974, %v978
        %v982 = vadd.f32 %v976, %v980
        %v983 = vmul.f32 %v981, 0.036000773
        %v984 = vmul.f32 %v982, 0.036000773
        %v985 = vadd.f32 %v971, %v983
        %v986 = vadd.f32 %v972, %v984
        %987 = vrot.lane.b32.xlu0 %v941, 6
        %v988 = vpop.permute.xlu0 %987
        %989 = vrot.lane.b32.xlu0 %v942, 6
        %v990 = vpop.permute.xlu0 %989
        %991 = vrot.lane.b32.xlu0 %v941, 122
        %v992 = vpop.permute.xlu0 %991
        %993 = vrot.lane.b32.xlu0 %v942, 122
        %v994 = vpop.permute.xlu0 %993
        %v995 = vadd.f32 %v988, %v992
        %v996 = vadd.f32 %v990, %v994
        %v997 = vmul.f32 %v995, 0.10936069
        %v998 = vmul.f32 %v996, 0.10936069
        %v999 = vadd.f32 %v985, %v997
        %v1000 = vadd.f32 %v986, %v998
        %1001 = vrot.lane.b32.xlu0 %v941, 3
        %v1002 = vpop.permute.xlu0 %1001
        %1003 = vrot.lane.b32.xlu0 %v942, 3
        %v1004 = vpop.permute.xlu0 %1003
        %1005 = vrot.lane.b32.xlu0 %v941, 125
        %v1006 = vpop.permute.xlu0 %1005
        %1007 = vrot.lane.b32.xlu0 %v942, 125
        %v1008 = vpop.permute.xlu0 %1007
        %v1009 = vadd.f32 %v1002, %v1006
        %v1010 = vadd.f32 %v1004, %v1008
        %v1011 = vmul.f32 %v1009, 0.21300554
        %v1012 = vmul.f32 %v1010, 0.21300554
        %v1013 = vadd.f32 %v999, %v1011
        %v1014 = vadd.f32 %v1000, %v1012
        %v1015 = vsub.f32 %v1013, %v755
        %v1016 = vsub.f32 %v1014, %v756
        %v1017 = vld [vmem:[#allocation5 + $0x8] sm:$0xff]
        %v1018 = vld [vmem:[#allocation5 + $0x10] sm:$0xff]
        %v1019 = vmul.f32 %v1017, 0.26601171
        %v1020 = vmul.f32 %v1018, 0.26601171
        %v1021 = vld [vmem:[#allocation5 + $0x3] sm:$0xff]
        %v1022 = vld [vmem:[#allocation5 + $0xb] sm:$0xff]
        %v1023 = vld [vmem:[#allocation5 + $0xd] sm:$0xff]
        %v1024 = vld [vmem:[#allocation5 + $0x15] sm:$0xff]
        %v1025 = vadd.f32 %v1021, %v1023
        %v1026 = vadd.f32 %v1022, %v1024
        %v1027 = vmul.f32 %v1025, 0.0010283801
        %v1028 = vmul.f32 %v1026, 0.0010283801
        %v1029 = vadd.f32 %v1019, %v1027
        %v1030 = vadd.f32 %v1020, %v1028
        %v1031 = vld [vmem:[#allocation5 + $0x4] sm:$0xff]
        %v1032 = vld [vmem:[#allocation5 + $0xc] sm:$0xff]
        %v1033 = vld [vmem:[#allocation5 + $0x14] sm:$0xff]
        %v1034 = vadd.f32 %v1031, %v1032
        %v1035 = vadd.f32 %v1032, %v1033
        %v1036 = vmul.f32 %v1034, 0.007598758
        %v1037 = vmul.f32 %v1035, 0.007598758
        %v1038 = vadd.f32 %v1029, %v1036
        %v1039 = vadd.f32 %v1030, %v1037
        %v1040 = vld [vmem:[#allocation5 + $0x5] sm:$0xff]
        %v1041 = vld [vmem:[#allocation5 + $0x13] sm:$0xff]
        %v1042 = vadd.f32 %v1040, %v1022
        %v1043 = vadd.f32 %v1023, %v1041
        %v1044 = vmul.f32 %v1042, 0.036000773
        %v1045 = vmul.f32 %v1043, 0.036000773
        %v1046 = vadd.f32 %v1038, %v1044
        %v1047 = vadd.f32 %v1039, %v1045
        %v1048 = vld [vmem:[#allocation5 + $0x6] sm:$0xff]
        %v1049 = vld [vmem:[#allocation5 + $0xe] sm:$0xff]
        %v1050 = vld [vmem:[#allocation5 + $0xa] sm:$0xff]
        %v1051 = vld [vmem:[#allocation5 + $0x12] sm:$0xff]
        %v1052 = vadd.f32 %v1048, %v1050
        %v1053 = vadd.f32 %v1049, %v1051
        %v1054 = vmul.f32 %v1052, 0.10936069
        %v1055 = vmul.f32 %v1053, 0.10936069
        %v1056 = vadd.f32 %v1046, %v1054
        %v1057 = vadd.f32 %v1047, %v1055
        %v1058 = vld [vmem:[#allocation5 + $0x7] sm:$0xff]
        %v1059 = vld [vmem:[#allocation5 + $0xf] sm:$0xff]
        %v1060 = vld [vmem:[#allocation5 + $0x9] sm:$0xff]
        %v1061 = vld [vmem:[#allocation5 + $0x11] sm:$0xff]
        %v1062 = vadd.f32 %v1058, %v1060
        %v1063 = vadd.f32 %v1059, %v1061
        %v1064 = vmul.f32 %v1062, 0.21300554
        %v1065 = vmul.f32 %v1063, 0.21300554
        %v1066 = vadd.f32 %v1056, %v1064
        %v1067 = vadd.f32 %v1057, %v1065
        %v1068 = vmul.f32 %v1066, 0.26601171
        %v1069 = vmul.f32 %v1067, 0.26601171
        %1070 = vrot.lane.b32.xlu0 %v1066, 15
        %v1071 = vpop.permute.xlu0 %1070
        %1072 = vrot.lane.b32.xlu0 %v1067, 15
        %v1073 = vpop.permute.xlu0 %1072
        %1074 = vrot.lane.b32.xlu0 %v1066, 113
        %v1075 = vpop.permute.xlu0 %1074
        %1076 = vrot.lane.b32.xlu0 %v1067, 113
        %v1077 = vpop.permute.xlu0 %1076
        %v1078 = vadd.f32 %v1071, %v1075
        %v1079 = vadd.f32 %v1073, %v1077
        %v1080 = vmul.f32 %v1078, 0.0010283801
        %v1081 = vmul.f32 %v1079, 0.0010283801
        %v1082 = vadd.f32 %v1068, %v1080
        %v1083 = vadd.f32 %v1069, %v1081
        %1084 = vrot.lane.b32.xlu0 %v1066, 12
        %v1085 = vpop.permute.xlu0 %1084
        %1086 = vrot.lane.b32.xlu0 %v1067, 12
        %v1087 = vpop.permute.xlu0 %1086
        %1088 = vrot.lane.b32.xlu0 %v1066, 116
        %v1089 = vpop.permute.xlu0 %1088
        %1090 = vrot.lane.b32.xlu0 %v1067, 116
        %v1091 = vpop.permute.xlu0 %1090
        %v1092 = vadd.f32 %v1085, %v1089
        %v1093 = vadd.f32 %v1087, %v1091
        %v1094 = vmul.f32 %v1092, 0.007598758
        %v1095 = vmul.f32 %v1093, 0.007598758
        %v1096 = vadd.f32 %v1082, %v1094
        %v1097 = vadd.f32 %v1083, %v1095
        %1098 = vrot.lane.b32.xlu0 %v1066, 9
        %v1099 = vpop.permute.xlu0 %1098
        %1100 = vrot.lane.b32.xlu0 %v1067, 9
        %v1101 = vpop.permute.xlu0 %1100
        %1102 = vrot.lane.b32.xlu0 %v1066, 119
        %v1103 = vpop.permute.xlu0 %1102
        %1104 = vrot.lane.b32.xlu0 %v1067, 119
        %v1105 = vpop.permute.xlu0 %1104
        %v1106 = vadd.f32 %v1099, %v1103
        %v1107 = vadd.f32 %v1101, %v1105
        %v1108 = vmul.f32 %v1106, 0.036000773
        %v1109 = vmul.f32 %v1107, 0.036000773
        %v1110 = vadd.f32 %v1096, %v1108
        %v1111 = vadd.f32 %v1097, %v1109
        %1112 = vrot.lane.b32.xlu0 %v1066, 6
        %v1113 = vpop.permute.xlu0 %1112
        %1114 = vrot.lane.b32.xlu0 %v1067, 6
        %v1115 = vpop.permute.xlu0 %1114
        %1116 = vrot.lane.b32.xlu0 %v1066, 122
        %v1117 = vpop.permute.xlu0 %1116
        %1118 = vrot.lane.b32.xlu0 %v1067, 122
        %v1119 = vpop.permute.xlu0 %1118
        %v1120 = vadd.f32 %v1113, %v1117
        %v1121 = vadd.f32 %v1115, %v1119
        %v1122 = vmul.f32 %v1120, 0.10936069
        %v1123 = vmul.f32 %v1121, 0.10936069
        %v1124 = vadd.f32 %v1110, %v1122
        %v1125 = vadd.f32 %v1111, %v1123
        %1126 = vrot.lane.b32.xlu0 %v1066, 3
        %v1127 = vpop.permute.xlu0 %1126
        %1128 = vrot.lane.b32.xlu0 %v1067, 3
        %v1129 = vpop.permute.xlu0 %1128
        %1130 = vrot.lane.b32.xlu0 %v1066, 125
        %v1131 = vpop.permute.xlu0 %1130
        %1132 = vrot.lane.b32.xlu0 %v1067, 125
        %v1133 = vpop.permute.xlu0 %1132
        %v1134 = vadd.f32 %v1127, %v1131
        %v1135 = vadd.f32 %v1129, %v1133
        %v1136 = vmul.f32 %v1134, 0.21300554
        %v1137 = vmul.f32 %v1135, 0.21300554
        %v1138 = vadd.f32 %v1124, %v1136
        %v1139 = vadd.f32 %v1125, %v1137
        %v1140 = vsub.f32 %v1138, %v880
        %v1141 = vsub.f32 %v1139, %v881
        %v1142 = vadd.f32 %v1015, %v1140
        %v1143 = vadd.f32 %v1016, %v1141
        %v1144 = vadd.f32 %v1142, 0.0009
        %v1145 = vadd.f32 %v1143, 0.0009
        %v1146 = vmul.f32 %v886, %v1144
        %v1147 = vmul.f32 %v887, %v1145
        %v1148 = vld [vmem:[#allocation6 + $0x8] sm:$0xff]
        %v1149 = vld [vmem:[#allocation6 + $0x10] sm:$0xff]
        %v1150 = vmul.f32 %v1148, 0.26601171
        %v1151 = vmul.f32 %v1149, 0.26601171
        %v1152 = vld [vmem:[#allocation6 + $0x3] sm:$0xff]
        %v1153 = vld [vmem:[#allocation6 + $0xb] sm:$0xff]
        %v1154 = vld [vmem:[#allocation6 + $0xd] sm:$0xff]
        %v1155 = vld [vmem:[#allocation6 + $0x15] sm:$0xff]
        %v1156 = vadd.f32 %v1152, %v1154
        %v1157 = vadd.f32 %v1153, %v1155
        %v1158 = vmul.f32 %v1156, 0.0010283801
        %v1159 = vmul.f32 %v1157, 0.0010283801
        %v1160 = vadd.f32 %v1150, %v1158
        %v1161 = vadd.f32 %v1151, %v1159
        %v1162 = vld [vmem:[#allocation6 + $0x4] sm:$0xff]
        %v1163 = vld [vmem:[#allocation6 + $0xc] sm:$0xff]
        %v1164 = vld [vmem:[#allocation6 + $0x14] sm:$0xff]
        %v1165 = vadd.f32 %v1162, %v1163
        %v1166 = vadd.f32 %v1163, %v1164
        %v1167 = vmul.f32 %v1165, 0.007598758
        %v1168 = vmul.f32 %v1166, 0.007598758
        %v1169 = vadd.f32 %v1160, %v1167
        %v1170 = vadd.f32 %v1161, %v1168
        %v1171 = vld [vmem:[#allocation6 + $0x5] sm:$0xff]
        %v1172 = vld [vmem:[#allocation6 + $0x13] sm:$0xff]
        %v1173 = vadd.f32 %v1171, %v1153
        %v1174 = vadd.f32 %v1154, %v1172
        %v1175 = vmul.f32 %v1173, 0.036000773
        %v1176 = vmul.f32 %v1174, 0.036000773
        %v1177 = vadd.f32 %v1169, %v1175
        %v1178 = vadd.f32 %v1170, %v1176
        %v1179 = vld [vmem:[#allocation6 + $0x6] sm:$0xff]
        %v1180 = vld [vmem:[#allocation6 + $0xe] sm:$0xff]
        %v1181 = vld [vmem:[#allocation6 + $0xa] sm:$0xff]
        %v1182 = vld [vmem:[#allocation6 + $0x12] sm:$0xff]
        %v1183 = vadd.f32 %v1179, %v1181
        %v1184 = vadd.f32 %v1180, %v1182
        %v1185 = vmul.f32 %v1183, 0.10936069
        %v1186 = vmul.f32 %v1184, 0.10936069
        %v1187 = vadd.f32 %v1177, %v1185
        %v1188 = vadd.f32 %v1178, %v1186
        %v1189 = vld [vmem:[#allocation6 + $0x7] sm:$0xff]
        %v1190 = vld [vmem:[#allocation6 + $0xf] sm:$0xff]
        %v1191 = vld [vmem:[#allocation6 + $0x9] sm:$0xff]
        %v1192 = vld [vmem:[#allocation6 + $0x11] sm:$0xff]
        %v1193 = vadd.f32 %v1189, %v1191
        %v1194 = vadd.f32 %v1190, %v1192
        %v1195 = vmul.f32 %v1193, 0.21300554
        %v1196 = vmul.f32 %v1194, 0.21300554
        %v1197 = vadd.f32 %v1187, %v1195
        %v1198 = vadd.f32 %v1188, %v1196
        %v1199 = vmul.f32 %v1197, 0.26601171
        %v1200 = vmul.f32 %v1198, 0.26601171
        %1201 = vrot.lane.b32.xlu0 %v1197, 15
        %v1202 = vpop.permute.xlu0 %1201
        %1203 = vrot.lane.b32.xlu0 %v1198, 15
        %v1204 = vpop.permute.xlu0 %1203
        %1205 = vrot.lane.b32.xlu0 %v1197, 113
        %v1206 = vpop.permute.xlu0 %1205
        %1207 = vrot.lane.b32.xlu0 %v1198, 113
        %v1208 = vpop.permute.xlu0 %1207
        %v1209 = vadd.f32 %v1202, %v1206
        %v1210 = vadd.f32 %v1204, %v1208
        %v1211 = vmul.f32 %v1209, 0.0010283801
        %v1212 = vmul.f32 %v1210, 0.0010283801
        %v1213 = vadd.f32 %v1199, %v1211
        %v1214 = vadd.f32 %v1200, %v1212
        %1215 = vrot.lane.b32.xlu0 %v1197, 12
        %v1216 = vpop.permute.xlu0 %1215
        %1217 = vrot.lane.b32.xlu0 %v1198, 12
        %v1218 = vpop.permute.xlu0 %1217
        %1219 = vrot.lane.b32.xlu0 %v1197, 116
        %v1220 = vpop.permute.xlu0 %1219
        %1221 = vrot.lane.b32.xlu0 %v1198, 116
        %v1222 = vpop.permute.xlu0 %1221
        %v1223 = vadd.f32 %v1216, %v1220
        %v1224 = vadd.f32 %v1218, %v1222
        %v1225 = vmul.f32 %v1223, 0.007598758
        %v1226 = vmul.f32 %v1224, 0.007598758
        %v1227 = vadd.f32 %v1213, %v1225
        %v1228 = vadd.f32 %v1214, %v1226
        %1229 = vrot.lane.b32.xlu0 %v1197, 9
        %v1230 = vpop.permute.xlu0 %1229
        %1231 = vrot.lane.b32.xlu0 %v1198, 9
        %v1232 = vpop.permute.xlu0 %1231
        %1233 = vrot.lane.b32.xlu0 %v1197, 119
        %v1234 = vpop.permute.xlu0 %1233
        %1235 = vrot.lane.b32.xlu0 %v1198, 119
        %v1236 = vpop.permute.xlu0 %1235
        %v1237 = vadd.f32 %v1230, %v1234
        %v1238 = vadd.f32 %v1232, %v1236
        %v1239 = vmul.f32 %v1237, 0.036000773
        %v1240 = vmul.f32 %v1238, 0.036000773
        %v1241 = vadd.f32 %v1227, %v1239
        %v1242 = vadd.f32 %v1228, %v1240
        %1243 = vrot.lane.b32.xlu0 %v1197, 6
        %v1244 = vpop.permute.xlu0 %1243
        %1245 = vrot.lane.b32.xlu0 %v1198, 6
        %v1246 = vpop.permute.xlu0 %1245
        %1247 = vrot.lane.b32.xlu0 %v1197, 122
        %v1248 = vpop.permute.xlu0 %1247
        %1249 = vrot.lane.b32.xlu0 %v1198, 122
        %v1250 = vpop.permute.xlu0 %1249
        %v1251 = vadd.f32 %v1244, %v1248
        %v1252 = vadd.f32 %v1246, %v1250
        %v1253 = vmul.f32 %v1251, 0.10936069
        %v1254 = vmul.f32 %v1252, 0.10936069
        %v1255 = vadd.f32 %v1241, %v1253
        %v1256 = vadd.f32 %v1242, %v1254
        %1257 = vrot.lane.b32.xlu0 %v1197, 3
        %v1258 = vpop.permute.xlu0 %1257
        %1259 = vrot.lane.b32.xlu0 %v1198, 3
        %v1260 = vpop.permute.xlu0 %1259
        %1261 = vrot.lane.b32.xlu0 %v1197, 125
        %v1262 = vpop.permute.xlu0 %1261
        %1263 = vrot.lane.b32.xlu0 %v1198, 125
        %v1264 = vpop.permute.xlu0 %1263
        %v1265 = vadd.f32 %v1258, %v1262
        %v1266 = vadd.f32 %v1260, %v1264
        %v1267 = vmul.f32 %v1265, 0.21300554
        %v1268 = vmul.f32 %v1266, 0.21300554
        %v1269 = vadd.f32 %v1255, %v1267
        %v1270 = vadd.f32 %v1256, %v1268
        %v1271 = vsub.f32 %v1269, %v882
        %v1272 = vsub.f32 %v1270, %v883
        %v1273 = vmul.f32 %v1271, 2.0
        %v1274 = vmul.f32 %v1272, 2.0
        %v1275 = vadd.f32 %v1273, 0.0009
        %v1276 = vadd.f32 %v1274, 0.0009
        %v1277 = vmul.f32 %v890, %v1275
        %v1278 = vmul.f32 %v891, %v1276
        %v1279 = vrcp.pop %v1146
        %v1280 = vrcp.pop %v1147
        %v1281 = vmul.f32 %v1146, %v1279
        %v1282 = vmul.f32 %v1147, %v1280
        %v1283 = vsub.f32 2.0, %v1281
        %v1284 = vsub.f32 2.0, %v1282
        %v1285 = vmul.f32 %v1279, %v1283
        %v1286 = vmul.f32 %v1280, %v1284
        %v1287 = vlaneseq
        %v1288 = vand.u32 %v1287, 127
        %vm1289 = vcmp.lt.s32.totalorder %v1288, 48
        %v1290 = vmul.f32 %v1277, %v1285
        %v1291 = vmul.f32 %v1278, %v1286
        %v1292 = vsel %vm1289, %v1290, 0.0
        %v1293 = vsel %vm1289, %v1291, 0.0
        %v1294 = vadd.f32 %v1292, %v1293
        %v1295 = vrot.slane %v1294, 4
        %v1296 = vadd.f32 %v1294, %v1295
        %v1297 = vrot.slane %v1296, 2
        %v1298 = vadd.f32 %v1296, %v1297
        %v1299 = vrot.slane %v1298, 1
        %v1300 = vadd.f32 %v1298, %v1299
        %1301 = vst [vmem:[%s537] sm:$0x1] %v1300
        %1302 = vst [vmem:[%s537 + $0x1] sm:$0x1] %v631
        %s1303 = sand.u32 %s254, 1
        %s1304 = scalar_lea.sflag [#allocation9], %s1303
        %s1305 = sand.u32 %s254, 1
        %s1306 = smul.addr %s1305, 8
        %s1307 = scalar_lea.vmem [#allocation18], %s1306
        // Predicated region
        $region77: #{tpu_custom_call.1} parent=43 // pred_check
          %p1308 = pneg %p264
        $region78: #{tpu_custom_call.1} parent=43 // pred_check_branch
          %1310 = sbr.rel (%p1308) target = $region80
        $region79: #{tpu_custom_call.1} parent=43 // pred_region
          %s1312 = ssub.s32 128, 128
          %1313 = vsyncadd %s1304, %s1312
          %s1314 = sadd.s32 %s37, %s36
          %s1315 = smul.addr %s1314, 128
          %s1316 = scalar_lea.hbm %s6, %s1315
          %s1318 = sshll.u32 %s1307, 4
          %s1319 = int_to_ptr.vmem [resolvable:$true] %s1318
          %1321 = dma.vmem_to_hbm [thread:$0]  %s1319, 128, %s1316, %s1304
        $region80: #{tpu_custom_call.1} parent=43 // pred_fallthru
          _
      $region44: #{tpu_custom_call.1} parent=5 // pred_fallthru
        _
      %p1322 = scmp.le.s32.totalorder 2, %s27
      // Predicated region
      $region81: #{tpu_custom_call.1} parent=5 // pred_check
        %p1323 = pneg %p1322
      $region82: #{tpu_custom_call.1} parent=5 // pred_check_branch
        %1325 = sbr.rel (%p1323) target = $region84
      $region83: #{tpu_custom_call.1} parent=5 // pred_region
        %s1326 = ssub.s32 %s27, 2
        // Predicated region
        $region85: #{tpu_custom_call.1} parent=83 // pred_check
          %p1327 = pneg %p270
        $region86: #{tpu_custom_call.1} parent=83 // pred_check_branch
          %1329 = sbr.rel (%p1327) target = $region88
        $region87: #{tpu_custom_call.1} parent=83 // pred_region
          %s1330 = sand.u32 %s255, 1
          %s1331 = scalar_lea.sflag [#allocation9], %s1330
          %s1332 = sand.u32 %s255, 1
          %s1333 = smul.addr %s1332, 8
          %s1334 = scalar_lea.vmem [#allocation18], %s1333
          %1335 = dma.done %s1331, 128
        $region88: #{tpu_custom_call.1} parent=83 // pred_fallthru
          _
      $region84: #{tpu_custom_call.1} parent=5 // pred_fallthru
        _
    $region6: #{tpu_custom_call.1} parent=1 // loop_footer
      %s31 = sadd.s32 1, %s27
    $region7: #{tpu_custom_call.1} parent=1 // loop_footer_branch
      %26 = sbr.rel target = $region3
    $region8: #{tpu_custom_call.1} parent=1 // loop_exit
      _
    %1336 = vsyncpa [#allocation8], 1
    %s1337 = scalar_lea.sflag [#allocation8], 1
    %1338 = vsyncpa %s1337, 1
    %1339 = vsyncpa [#allocation11], 1
    %s1340 = scalar_lea.sflag [#allocation11], 1
    %1341 = vsyncpa %s1340, 1
    %1342 = vsyncpa [#allocation14], 1
    %s1343 = scalar_lea.sflag [#allocation14], 1
    %1344 = vsyncpa %s1343, 1
    %1345 = vsyncpa [#allocation17], 1
    %s1346 = scalar_lea.sflag [#allocation17], 1
    %1347 = vsyncpa %s1346, 1
    %1348 = vsyncpa [#allocation9], 1
    %s1349 = scalar_lea.sflag [#allocation9], 1
    %1350 = vsyncpa %s1349, 1

</llo_original>
